<compile_context>
chip_gen: v5e
topology: v5e:2x2
jax: 0.10.0
libtpu: 0.0.40
codegen_flags: <defaults>
</compile_context>

<pallas_src>
import functools
import math

import jax
import jax.numpy as jnp
from jax.experimental import pallas as pl
from jax.experimental.pallas import tpu as pltpu

NEG_SLOPE = 0.1  # LeakyReLU(negative_slope=0.1) used throughout the block


def _leaky(x):
    return jnp.where(x > 0, x, NEG_SLOPE * x)


def _round_up(v, m):
    return ((v + m - 1) // m) * m


def _vmem_capacity_bytes():
    try:
        info = pltpu.get_tpu_info()
        cap = int(getattr(info, "vmem_capacity_bytes", 0) or 0)
        if cap > 0:
            return cap
    except Exception:
        pass
    return 64 * 1024 * 1024  # conservative fallback (v7x per-core VMEM)


# ------------------------------ Pallas kernel -------------------------------

def _bottleneck_kernel(*refs, stride, rb, wo, project):
    """Fused bottleneck block for one (batch, group, row-block) grid step.

    refs (project=True):  x_hbm, w1, w2, w3, wp, out, xbuf, sem
    refs (project=False): x_hbm, w1, w2, w3,     out, xbuf, sem
      x_hbm : (N, s*s, Hq, Wq, Cin) bf16 phase-decomposed zero-padded input (HBM)
      w1    : (Cin, C)    bf16
      w2    : (9*C, C)    bf16   (K index = (dh*3+dw)*C + cin)
      w3    : (C, Cop)    bf16
      wp    : (Cin, Cop)  bf16   (projection, only if project)
      out   : (1, rb*wo, Cop) f32
      xbuf  : (2, s*s, rb+2, Wq, Cin) bf16 VMEM double buffer
      sem   : DMA semaphores (2,)
    """
    if project:
        x_hbm, w1_ref, w2_ref, w3_ref, wp_ref, o_ref, xbuf, sem = refs
    else:
        x_hbm, w1_ref, w2_ref, w3_ref, o_ref, xbuf, sem = refs
        wp_ref = None

    s = stride
    win = rb + 2                       # row window (+2 halo) in phase coords
    wq = xbuf.shape[-2]
    cin = xbuf.shape[-1]
    c = w1_ref.shape[1]
    cop = w3_ref.shape[1]
    m = rb * wo

    n = pl.program_id(0)
    g = pl.program_id(1)
    i = pl.program_id(2)
    gpi = pl.num_programs(2)
    blk = g * gpi + i                  # global row-block index
    slot = i % 2

    def start_fetch(block_idx, slot_):
        pltpu.make_async_copy(
            x_hbm.at[n, :, pl.ds(block_idx * rb, win), :, :],
            xbuf.at[slot_], sem.at[slot_]).start()

    # First row block of this (batch, group): issue its own fetch (waited below).
    @pl.when(i == 0)
    def _():
        start_fetch(blk, slot)

    # Prefetch the next row window of this group while computing the current one.
    @pl.when(i + 1 < gpi)
    def _():
        start_fetch(blk + 1, 1 - slot)

    # Wait for the current window (descriptor only needs the matching shape).
    pltpu.make_async_copy(
        x_hbm.at[n, :, pl.ds(0, win), :, :], xbuf.at[slot], sem.at[slot]).wait()

    x_all = xbuf[slot]                 # (s*s, win, wq, cin) bf16

    # ---- conv1 (1x1) + LeakyReLU per stride-phase on the row window.
    # Zero-padded x gives leaky(0 @ w1) == 0, which is exactly conv2's zero
    # padding of conv1's output (valid: the module's convs have no bias / BN).
    w1 = w1_ref[...]
    y1 = {}
    for ph in range(s):
        for pw in range(s):
            xw = x_all[ph * s + pw]                                # (win, wq, cin)
            a = jnp.dot(xw.reshape(win * wq, cin), w1,
                        preferred_element_type=jnp.float32)
            y1[(ph, pw)] = _leaky(a).astype(jnp.bfloat16).reshape(win, wq, c)

    # ---- conv2 (3x3, stride s): ONE big-K matmul (im2col patch, K = 9C).
    taps = []
    for dh in range(3):
        ph, oh = dh % s, dh // s
        for dw in range(3):
            pw, ow = dw % s, dw // s
            taps.append(y1[(ph, pw)][oh:oh + rb, ow:ow + wo, :].reshape(m, c))
    patch = jnp.concatenate(taps, axis=-1)                         # (M, 9C) bf16
    y2 = _leaky(jnp.dot(patch, w2_ref[...],
                        preferred_element_type=jnp.float32)).astype(jnp.bfloat16)

    # ---- conv3 (1x1) + LeakyReLU.
    # NOTE: cannot be fused with the projection matmul — LeakyReLU is applied to
    # conv3 BEFORE the residual add in the module, so the matmuls stay separate.
    c3 = _leaky(jnp.dot(y2, w3_ref[...], preferred_element_type=jnp.float32))

    # ---- residual path: x sampled at (ho*s, wo*s); with the +1 zero-pad ring
    # that is stride-phase (ph, pw) = (1 % s, 1 % s) at in-phase offset 1 // s.
    rph, rpw = 1 % s, 1 % s
    ro = 1 // s
    xr = x_all[rph * s + rpw][ro:ro + rb, ro:ro + wo, :].reshape(m, cin)
    if project:
        res = jnp.dot(xr, wp_ref[...], preferred_element_type=jnp.float32)
    else:
        # Identity path (shape-valid only when Cin == 4C, enforced by wrapper).
        res = xr.astype(jnp.float32)
        if cop > cin:
            res = jnp.concatenate(
                [res, jnp.zeros((m, cop - cin), jnp.float32)], axis=1)

    o_ref[0] = _leaky(c3 + res).astype(o_ref.dtype)


# -------------------------------- wrapper ------------------------------------

def _choose_tiling(ho, wo, wq, cin, c, cop, s, n_batch, vmem_limit):
    """Pick output-row block size rb, #parallel row groups gp, blocks/group gpi."""
    # Per output row: x window (x2 buffers) + y1 windows + im2col patch +
    # conv2 acc/y2 + c3/res f32 + the double-buffered f32 output block.
    per_row = (2 * s * s * wq * cin * 2 +
               s * s * wq * c * 2 +
               wo * (9 * c * 2 + c * 6 + cop * 8 + 2 * cop * 4))
    fixed = 2 * 2 * (cin * c + 9 * c * c + c * cop + cin * cop)  # weights, x2 bufs
    budget = max(int(0.45 * vmem_limit) - fixed, per_row)
    unit = 8 // math.gcd(wo, 8)        # keeps rb*wo % 8 == 0 (sublane constraint)
    rb = max(unit, (budget // per_row) // unit * unit)
    rb = min(rb, _round_up(ho, unit))
    gh = -(-ho // rb)
    # Megacore / v7x 2 TCs: with a single image make sure there are >= 2
    # independent parallel work units by splitting the row blocks into 2 groups.
    if n_batch == 1 and gh < 2:
        rb_half = max(unit, _round_up(-(-ho // 2), unit))
        if rb_half < rb:
            rb, gh = rb_half, -(-ho // rb_half)
    gp = 2 if (n_batch == 1 and gh >= 2) else 1
    gpi = -(-gh // gp)
    return rb, gp, gpi


def resnet_bottleneck_block(x_nchw, w1, w2, w3, wp, stride=1):
    """Forward pass of ResNetBottleneckBlock.

    x_nchw : (N, Cin, H, W) float32
    w1 : (C, Cin, 1, 1)   conv1 1x1, stride 1, LeakyReLU(0.1)
    w2 : (C, C, 3, 3)     conv2 3x3, stride `stride`, pad 1, LeakyReLU(0.1)
    w3 : (4C, C, 1, 1)    conv3 1x1, stride 1, LeakyReLU(0.1)
    wp : (4C, Cin, 1, 1)  projection 1x1, stride `stride`, no activation
    returns (N, 4C, Ho, Wo) float32
    """
    N, Cin, H, W = x_nchw.shape
    C = w1.shape[0]
    C4 = w3.shape[0]
    s = int(stride)
    Ho = (H - 1) // s + 1
    Wo = (W - 1) // s + 1
    # The module projects iff conv2's spatial or channel count differs from x's
    # (it compares against conv2's C, i.e. the bottleneck width, not 4C).
    needs_proj = ((H, W) != (Ho, Wo)) or (Cin != C)
    if (not needs_proj) and Cin != C4:
        # Mirrors the latent shape error in the PyTorch module's identity path.
        raise ValueError("identity residual requires in_channels == 4*out_channels")

    # Output channels: lane-dense padding only for real ResNet widths; tiny C4
    # keeps its native width (avoids multiplying the f32 HBM writeback).
    Cop = _round_up(C4, 128) if C4 >= 128 else C4

    vmem_cap = _vmem_capacity_bytes()
    vmem_limit = int(0.75 * vmem_cap)        # ~48 MiB on v7x, ~96 MiB on v5e/v6e

    Wq = _round_up(Wo + 2, 8)                # sublane-aligned phase-image width
    rb, gp, gpi = _choose_tiling(Ho, Wo, Wq, Cin, C, Cop, s, N, vmem_limit)
    gh = gp * gpi                            # padded number of row blocks
    Hq = gh * rb + 2
    Hp, Wp = s * Hq, s * Wq

    # NCHW -> NHWC, zero pad (1-ring + tiling), phase-decompose by stride, bf16.
    # x_ph[n, ph*s+pw, hq, wq, c] = x_pad[n, hq*s+ph, wq*s+pw, c]
    # TODO(synk): the padded/phase-decomposed copy is still one wrapper-side HBM
    # pass; moving the halo/zero handling fully in-kernel would remove it.
    x_nhwc = jnp.transpose(x_nchw, (0, 2, 3, 1))
    x_pad = jnp.pad(x_nhwc, ((0, 0), (1, Hp - H - 1), (1, Wp - W - 1), (0, 0)))
    if s == 1:
        xph = x_pad[:, None].astype(jnp.bfloat16)            # (N, 1, Hq, Wq, Cin)
    else:
        xph = (x_pad.reshape(N, Hq, s, Wq, s, Cin)
               .transpose(0, 2, 4, 1, 3, 5)
               .reshape(N, s * s, Hq, Wq, Cin)
               .astype(jnp.bfloat16))

    # Weights as bf16 matmul operands.
    w1m = w1.reshape(C, Cin).T.astype(jnp.bfloat16)                        # (Cin, C)
    w2m = jnp.transpose(w2, (2, 3, 1, 0)).reshape(9 * C, C).astype(jnp.bfloat16)
    w3m = w3.reshape(C4, C).T
    if Cop > C4:
        w3m = jnp.pad(w3m, ((0, 0), (0, Cop - C4)))
    w3m = w3m.astype(jnp.bfloat16)                                         # (C, Cop)

    in_specs = [
        pl.BlockSpec(memory_space=pl.ANY),            # x: manual row-window DMA
        pl.BlockSpec((Cin, C), lambda n, g, i: (0, 0)),
        pl.BlockSpec((9 * C, C), lambda n, g, i: (0, 0)),
        pl.BlockSpec((C, Cop), lambda n, g, i: (0, 0)),
    ]
    args = [xph, w1m, w2m, w3m]
    if needs_proj:
        wpm = wp.reshape(C4, Cin).T
        if Cop > C4:
            wpm = jnp.pad(wpm, ((0, 0), (0, Cop - C4)))
        wpm = wpm.astype(jnp.bfloat16)                                     # (Cin, Cop)
        in_specs.append(pl.BlockSpec((Cin, Cop), lambda n, g, i: (0, 0)))
        args.append(wpm)

    kernel = functools.partial(
        _bottleneck_kernel, stride=s, rb=rb, wo=Wo, project=needs_proj)

    out = pl.pallas_call(
        kernel,
        out_shape=jax.ShapeDtypeStruct((N, gh * rb * Wo, Cop), x_nchw.dtype),
        grid_spec=pltpu.PrefetchScalarGridSpec(
            num_scalar_prefetch=0,
            grid=(N, gp, gpi),
            in_specs=in_specs,
            out_specs=pl.BlockSpec((1, rb * Wo, Cop),
                                   lambda n, g, i: (n, g * gpi + i, 0)),
            scratch_shapes=[
                pltpu.VMEM((2, s * s, rb + 2, Wq, Cin), jnp.bfloat16),
                pltpu.SemaphoreType.DMA((2,)),
            ]),
        compiler_params=pltpu.CompilerParams(
            dimension_semantics=("parallel", "parallel", "arbitrary"),
            vmem_limit_bytes=vmem_limit,
        ),
    )(*args)

    out = out.reshape(N, gh * rb, Wo, Cop)[:, :Ho, :, :C4]
    # NCHW at the module boundary (matches the PyTorch spec).
    return jnp.transpose(out, (0, 3, 1, 2))


# ---------------------------- reference (XLA) ---------------------------------

def _ref_conv(x, w, stride, pad):
    return jax.lax.conv_general_dilated(
        x, w, window_strides=(stride, stride),
        padding=[(pad, pad), (pad, pad)],
        dimension_numbers=("NCHW", "OIHW", "NCHW"))


def _ref_block(x, w1, w2, w3, wp, stride):
    # bf16-matched reference: rounds matmul operands the same way the kernel does,
    # keeps activations / residual add in f32.
    bf = lambda t: t.astype(jnp.bfloat16).astype(jnp.float32)
    x32 = bf(x)
    w1f, w2f, w3f, wpf = bf(w1), bf(w2), bf(w3), bf(wp)
    c1 = bf(_leaky(_ref_conv(x32, w1f, 1, 0)))
    c2 = bf(_leaky(_ref_conv(c1, w2f, stride, 1)))
    c3 = _leaky(_ref_conv(c2, w3f, 1, 0))
    if x.shape[2:4] != c2.shape[2:4] or x.shape[1] != c2.shape[1]:
        X = _ref_conv(x32, wpf, stride, 0)
    else:
        X = x32
    return _leaky(c3 + X)


# ---------------------------------- main --------------------------------------

if __name__ == "__main__":
    key = jax.random.PRNGKey(0)
    k0, k1, k2, k3, k4 = jax.random.split(key, 5)

    N, Cin, H, W = 2, 4, 16, 16
    Cout = 8
    stride = 2

    x = jax.random.normal(k0, (N, Cin, H, W), jnp.float32)

    def init_w(k, shape):
        fan_in = shape[1] * shape[2] * shape[3]
        return jax.random.normal(k, shape, jnp.float32) / jnp.sqrt(float(fan_in))

    w1 = init_w(k1, (Cout, Cin, 1, 1))
    w2 = init_w(k2, (Cout, Cout, 3, 3))
    w3 = init_w(k3, (4 * Cout, Cout, 1, 1))
    wp = init_w(k4, (4 * Cout, Cin, 1, 1))

    fwd = jax.jit(functools.partial(resnet_bottleneck_block, stride=stride))
    out = jax.block_until_ready(fwd(x, w1, w2, w3, wp))

    ref = _ref_block(x, w1, w2, w3, wp, stride)
    assert out.shape == ref.shape == (N, 4 * Cout, H // stride, W // stride), out.shape
    max_err = float(jnp.max(jnp.abs(out - ref)))
    assert jnp.allclose(out, ref, rtol=2e-2, atol=2e-2), max_err

    print("KERNEL_OK")
</pallas_src>

<mosaic_0001>
module attributes {stable_mosaic.version = 11 : i64} {
  func.func @_bottleneck_kernel(%arg0: i32, %arg1: i32, %arg2: i32, %arg3: memref<2x4x10x16x4xbf16, #tpu.memory_space<any>>, %arg4: memref<4x8xbf16, #tpu.memory_space<vmem>>, %arg5: memref<72x8xbf16, #tpu.memory_space<vmem>>, %arg6: memref<8x32xbf16, #tpu.memory_space<vmem>>, %arg7: memref<4x32xbf16, #tpu.memory_space<vmem>>, %arg8: memref<1x64x32xf32, #tpu.memory_space<vmem>>, %arg9: memref<2x4x10x16x4xbf16, #tpu.memory_space<vmem>>, %arg10: memref<2x!tpu.dma_semaphore, #tpu.memory_space<semaphore_mem>>) attributes {dimension_semantics = [#tpu.dimension_semantics<parallel>, #tpu.dimension_semantics<parallel>, #tpu.dimension_semantics<arbitrary>], iteration_bounds = array<i64: 2, 1, 1>, scalar_prefetch = 0 : i64, scratch_operands = 2 : i64, tpu.core_type = #tpu.core_type<tc>, window_params = [{}, {pipeline_mode = #tpu.pipeline_mode<synchronous>, transform_indices = @transform_1, window_bounds = array<i64: 4, 8>}, {pipeline_mode = #tpu.pipeline_mode<synchronous>, transform_indices = @transform_2, window_bounds = array<i64: 72, 8>}, {pipeline_mode = #tpu.pipeline_mode<synchronous>, transform_indices = @transform_3, window_bounds = array<i64: 8, 32>}, {pipeline_mode = #tpu.pipeline_mode<synchronous>, transform_indices = @transform_4, window_bounds = array<i64: 4, 32>}, {transform_indices = @transform_5, window_bounds = array<i64: 1, 64, 32>}]} {
    %c1_i32 = arith.constant 1 : i32
    %0 = arith.muli %arg1, %c1_i32 : i32
    %1 = arith.addi %0, %arg2 : i32
    %c2_i32 = arith.constant 2 : i32
    %c0_i32 = arith.constant 0 : i32
    %2 = arith.cmpi eq, %c2_i32, %c0_i32 : i32
    %c1_i32_0 = arith.constant 1 : i32
    %3 = arith.select %2, %c1_i32_0, %c2_i32 : i32
    %4 = arith.remsi %arg2, %3 : i32
    %c0_i32_1 = arith.constant 0 : i32
    %5 = arith.cmpi ne, %4, %c0_i32_1 : i32
    %c0_i32_2 = arith.constant 0 : i32
    %6 = arith.cmpi slt, %4, %c0_i32_2 : i32
    %c0_i32_3 = arith.constant 0 : i32
    %7 = arith.cmpi slt, %3, %c0_i32_3 : i32
    %8 = arith.xori %6, %7 : i1
    %9 = arith.andi %8, %5 : i1
    %10 = arith.addi %4, %3 : i32
    %11 = arith.select %9, %10, %4 : i32
    %c0_i32_4 = arith.constant 0 : i32
    %12 = arith.cmpi eq, %arg2, %c0_i32_4 : i32
    %13 = arith.extui %12 : i1 to i32
    %c0_i32_5 = arith.constant 0 : i32
    %14 = arith.cmpi ne, %13, %c0_i32_5 : i32
    scf.if %14 {
      %c8_i32 = arith.constant 8 : i32
      %122 = arith.muli %1, %c8_i32 : i32
      %c0_i32_51 = arith.constant 0 : i32
      %c0_i32_52 = arith.constant 0 : i32
      %c0_i32_53 = arith.constant 0 : i32
      %123 = tpu.memref_slice %arg3[%arg0, %c0_i32_51, %122, %c0_i32_52, %c0_i32_53] : memref<2x4x10x16x4xbf16, #tpu.memory_space<any>> -> memref<1x4x10x16x4xbf16, #tpu.memory_space<any>>
      %124 = tpu.memref_squeeze %123 : memref<1x4x10x16x4xbf16, #tpu.memory_space<any>> -> memref<4x10x16x4xbf16, #tpu.memory_space<any>>
      %c0_i32_54 = arith.constant 0 : i32
      %c0_i32_55 = arith.constant 0 : i32
      %c0_i32_56 = arith.constant 0 : i32
      %c0_i32_57 = arith.constant 0 : i32
      %125 = tpu.memref_slice %arg9[%11, %c0_i32_54, %c0_i32_55, %c0_i32_56, %c0_i32_57] : memref<2x4x10x16x4xbf16, #tpu.memory_space<vmem>> -> memref<1x4x10x16x4xbf16, #tpu.memory_space<vmem>>
      %126 = tpu.memref_squeeze %125 : memref<1x4x10x16x4xbf16, #tpu.memory_space<vmem>> -> memref<4x10x16x4xbf16, #tpu.memory_space<vmem>>
      %127 = tpu.memref_slice %arg10[%11] : memref<2x!tpu.dma_semaphore, #tpu.memory_space<semaphore_mem>> -> memref<1x!tpu.dma_semaphore, #tpu.memory_space<semaphore_mem>>
      %128 = tpu.memref_squeeze %127 : memref<1x!tpu.dma_semaphore, #tpu.memory_space<semaphore_mem>> -> memref<!tpu.dma_semaphore, #tpu.memory_space<semaphore_mem>>
      tpu.enqueue_dma source(%124 : memref<4x10x16x4xbf16, #tpu.memory_space<any>>) target(%126 : memref<4x10x16x4xbf16, #tpu.memory_space<vmem>>) target_semaphore(%128 : memref<!tpu.dma_semaphore, #tpu.memory_space<semaphore_mem>>)
    } else {
    }
    %c1_i32_6 = arith.constant 1 : i32
    %15 = arith.addi %arg2, %c1_i32_6 : i32
    %c1_i32_7 = arith.constant 1 : i32
    %16 = arith.cmpi slt, %15, %c1_i32_7 : i32
    %17 = arith.extui %16 : i1 to i32
    %c0_i32_8 = arith.constant 0 : i32
    %18 = arith.cmpi ne, %17, %c0_i32_8 : i32
    scf.if %18 {
      %c1_i32_51 = arith.constant 1 : i32
      %122 = arith.addi %1, %c1_i32_51 : i32
      %c1_i32_52 = arith.constant 1 : i32
      %123 = arith.subi %c1_i32_52, %11 : i32
      %c8_i32 = arith.constant 8 : i32
      %124 = arith.muli %122, %c8_i32 : i32
      %c0_i32_53 = arith.constant 0 : i32
      %c0_i32_54 = arith.constant 0 : i32
      %c0_i32_55 = arith.constant 0 : i32
      %125 = tpu.memref_slice %arg3[%arg0, %c0_i32_53, %124, %c0_i32_54, %c0_i32_55] : memref<2x4x10x16x4xbf16, #tpu.memory_space<any>> -> memref<1x4x10x16x4xbf16, #tpu.memory_space<any>>
      %126 = tpu.memref_squeeze %125 : memref<1x4x10x16x4xbf16, #tpu.memory_space<any>> -> memref<4x10x16x4xbf16, #tpu.memory_space<any>>
      %c0_i32_56 = arith.constant 0 : i32
      %c0_i32_57 = arith.constant 0 : i32
      %c0_i32_58 = arith.constant 0 : i32
      %c0_i32_59 = arith.constant 0 : i32
      %127 = tpu.memref_slice %arg9[%123, %c0_i32_56, %c0_i32_57, %c0_i32_58, %c0_i32_59] : memref<2x4x10x16x4xbf16, #tpu.memory_space<vmem>> -> memref<1x4x10x16x4xbf16, #tpu.memory_space<vmem>>
      %128 = tpu.memref_squeeze %127 : memref<1x4x10x16x4xbf16, #tpu.memory_space<vmem>> -> memref<4x10x16x4xbf16, #tpu.memory_space<vmem>>
      %129 = tpu.memref_slice %arg10[%123] : memref<2x!tpu.dma_semaphore, #tpu.memory_space<semaphore_mem>> -> memref<1x!tpu.dma_semaphore, #tpu.memory_space<semaphore_mem>>
      %130 = tpu.memref_squeeze %129 : memref<1x!tpu.dma_semaphore, #tpu.memory_space<semaphore_mem>> -> memref<!tpu.dma_semaphore, #tpu.memory_space<semaphore_mem>>
      tpu.enqueue_dma source(%126 : memref<4x10x16x4xbf16, #tpu.memory_space<any>>) target(%128 : memref<4x10x16x4xbf16, #tpu.memory_space<vmem>>) target_semaphore(%130 : memref<!tpu.dma_semaphore, #tpu.memory_space<semaphore_mem>>)
    } else {
    }
    %c0_i32_9 = arith.constant 0 : i32
    %c0_i32_10 = arith.constant 0 : i32
    %c0_i32_11 = arith.constant 0 : i32
    %c0_i32_12 = arith.constant 0 : i32
    %19 = tpu.memref_slice %arg3[%arg0, %c0_i32_9, %c0_i32_10, %c0_i32_11, %c0_i32_12] : memref<2x4x10x16x4xbf16, #tpu.memory_space<any>> -> memref<1x4x10x16x4xbf16, #tpu.memory_space<any>>
    %20 = tpu.memref_squeeze %19 : memref<1x4x10x16x4xbf16, #tpu.memory_space<any>> -> memref<4x10x16x4xbf16, #tpu.memory_space<any>>
    %c0_i32_13 = arith.constant 0 : i32
    %c0_i32_14 = arith.constant 0 : i32
    %c0_i32_15 = arith.constant 0 : i32
    %c0_i32_16 = arith.constant 0 : i32
    %21 = tpu.memref_slice %arg9[%11, %c0_i32_13, %c0_i32_14, %c0_i32_15, %c0_i32_16] : memref<2x4x10x16x4xbf16, #tpu.memory_space<vmem>> -> memref<1x4x10x16x4xbf16, #tpu.memory_space<vmem>>
    %22 = tpu.memref_squeeze %21 : memref<1x4x10x16x4xbf16, #tpu.memory_space<vmem>> -> memref<4x10x16x4xbf16, #tpu.memory_space<vmem>>
    %23 = tpu.memref_slice %arg10[%11] : memref<2x!tpu.dma_semaphore, #tpu.memory_space<semaphore_mem>> -> memref<1x!tpu.dma_semaphore, #tpu.memory_space<semaphore_mem>>
    %24 = tpu.memref_squeeze %23 : memref<1x!tpu.dma_semaphore, #tpu.memory_space<semaphore_mem>> -> memref<!tpu.dma_semaphore, #tpu.memory_space<semaphore_mem>>
    tpu.wait_dma2 semaphore(%24 : memref<!tpu.dma_semaphore, #tpu.memory_space<semaphore_mem>>) src(%20 : memref<4x10x16x4xbf16, #tpu.memory_space<any>>) dst(%22 : memref<4x10x16x4xbf16, #tpu.memory_space<vmem>>)
    %25 = arith.index_cast %11 : i32 to index
    %c0 = arith.constant 0 : index
    %c0_17 = arith.constant 0 : index
    %c0_18 = arith.constant 0 : index
    %c0_19 = arith.constant 0 : index
    %26 = vector.load %arg9[%25, %c0, %c0_17, %c0_18, %c0_19] : memref<2x4x10x16x4xbf16, #tpu.memory_space<vmem>>, vector<1x4x10x16x4xbf16>
    %27 = vector.shape_cast %26 : vector<1x4x10x16x4xbf16> to vector<4x10x16x4xbf16>
    %c0_20 = arith.constant 0 : index
    %c0_21 = arith.constant 0 : index
    %28 = vector.load %arg4[%c0_20, %c0_21] : memref<4x8xbf16, #tpu.memory_space<vmem>>, vector<4x8xbf16>
    %29 = vector.extract_strided_slice %27 {offsets = [0, 0, 0, 0], sizes = [1, 10, 16, 4], strides = [1, 1, 1, 1]} : vector<4x10x16x4xbf16> to vector<1x10x16x4xbf16>
    %30 = vector.shape_cast %29 : vector<1x10x16x4xbf16> to vector<10x16x4xbf16>
    %31 = vector.shape_cast %30 : vector<10x16x4xbf16> to vector<160x4xbf16>
    %cst = arith.constant dense<0.000000e+00> : vector<160x8xf32>
    %32 = tpu.matmul %31, %28, %cst {dimension_numbers = #tpu.dot_dimension_numbers<[1], [0], [0], [1], [0, 0, 1, 1], [], []>} : vector<160x4xbf16>, vector<4x8xbf16>, vector<160x8xf32> -> vector<160x8xf32>
    %cst_22 = arith.constant 0.000000e+00 : f32
    %33 = vector.broadcast %cst_22 : f32 to vector<160x8xf32>
    %34 = arith.cmpf ogt, %32, %33 : vector<160x8xf32>
    %cst_23 = arith.constant 1.000000e-01 : f32
    %35 = vector.broadcast %cst_23 : f32 to vector<160x8xf32>
    %36 = arith.mulf %35, %32 : vector<160x8xf32>
    %37 = arith.select %34, %32, %36 : vector<160x8xi1>, vector<160x8xf32>
    %38 = arith.truncf %37 : vector<160x8xf32> to vector<160x8xbf16>
    %39 = vector.shape_cast %38 : vector<160x8xbf16> to vector<10x16x8xbf16>
    %40 = vector.extract_strided_slice %27 {offsets = [1, 0, 0, 0], sizes = [1, 10, 16, 4], strides = [1, 1, 1, 1]} : vector<4x10x16x4xbf16> to vector<1x10x16x4xbf16>
    %41 = vector.shape_cast %40 : vector<1x10x16x4xbf16> to vector<10x16x4xbf16>
    %42 = vector.shape_cast %41 : vector<10x16x4xbf16> to vector<160x4xbf16>
    %cst_24 = arith.constant dense<0.000000e+00> : vector<160x8xf32>
    %43 = tpu.matmul %42, %28, %cst_24 {dimension_numbers = #tpu.dot_dimension_numbers<[1], [0], [0], [1], [0, 0, 1, 1], [], []>} : vector<160x4xbf16>, vector<4x8xbf16>, vector<160x8xf32> -> vector<160x8xf32>
    %cst_25 = arith.constant 0.000000e+00 : f32
    %44 = vector.broadcast %cst_25 : f32 to vector<160x8xf32>
    %45 = arith.cmpf ogt, %43, %44 : vector<160x8xf32>
    %cst_26 = arith.constant 1.000000e-01 : f32
    %46 = vector.broadcast %cst_26 : f32 to vector<160x8xf32>
    %47 = arith.mulf %46, %43 : vector<160x8xf32>
    %48 = arith.select %45, %43, %47 : vector<160x8xi1>, vector<160x8xf32>
    %49 = arith.truncf %48 : vector<160x8xf32> to vector<160x8xbf16>
    %50 = vector.shape_cast %49 : vector<160x8xbf16> to vector<10x16x8xbf16>
    %51 = vector.extract_strided_slice %27 {offsets = [2, 0, 0, 0], sizes = [1, 10, 16, 4], strides = [1, 1, 1, 1]} : vector<4x10x16x4xbf16> to vector<1x10x16x4xbf16>
    %52 = vector.shape_cast %51 : vector<1x10x16x4xbf16> to vector<10x16x4xbf16>
    %53 = vector.shape_cast %52 : vector<10x16x4xbf16> to vector<160x4xbf16>
    %cst_27 = arith.constant dense<0.000000e+00> : vector<160x8xf32>
    %54 = tpu.matmul %53, %28, %cst_27 {dimension_numbers = #tpu.dot_dimension_numbers<[1], [0], [0], [1], [0, 0, 1, 1], [], []>} : vector<160x4xbf16>, vector<4x8xbf16>, vector<160x8xf32> -> vector<160x8xf32>
    %cst_28 = arith.constant 0.000000e+00 : f32
    %55 = vector.broadcast %cst_28 : f32 to vector<160x8xf32>
    %56 = arith.cmpf ogt, %54, %55 : vector<160x8xf32>
    %cst_29 = arith.constant 1.000000e-01 : f32
    %57 = vector.broadcast %cst_29 : f32 to vector<160x8xf32>
    %58 = arith.mulf %57, %54 : vector<160x8xf32>
    %59 = arith.select %56, %54, %58 : vector<160x8xi1>, vector<160x8xf32>
    %60 = arith.truncf %59 : vector<160x8xf32> to vector<160x8xbf16>
    %61 = vector.shape_cast %60 : vector<160x8xbf16> to vector<10x16x8xbf16>
    %62 = vector.extract_strided_slice %27 {offsets = [3, 0, 0, 0], sizes = [1, 10, 16, 4], strides = [1, 1, 1, 1]} : vector<4x10x16x4xbf16> to vector<1x10x16x4xbf16>
    %63 = vector.shape_cast %62 : vector<1x10x16x4xbf16> to vector<10x16x4xbf16>
    %64 = vector.shape_cast %63 : vector<10x16x4xbf16> to vector<160x4xbf16>
    %cst_30 = arith.constant dense<0.000000e+00> : vector<160x8xf32>
    %65 = tpu.matmul %64, %28, %cst_30 {dimension_numbers = #tpu.dot_dimension_numbers<[1], [0], [0], [1], [0, 0, 1, 1], [], []>} : vector<160x4xbf16>, vector<4x8xbf16>, vector<160x8xf32> -> vector<160x8xf32>
    %cst_31 = arith.constant 0.000000e+00 : f32
    %66 = vector.broadcast %cst_31 : f32 to vector<160x8xf32>
    %67 = arith.cmpf ogt, %65, %66 : vector<160x8xf32>
    %cst_32 = arith.constant 1.000000e-01 : f32
    %68 = vector.broadcast %cst_32 : f32 to vector<160x8xf32>
    %69 = arith.mulf %68, %65 : vector<160x8xf32>
    %70 = arith.select %67, %65, %69 : vector<160x8xi1>, vector<160x8xf32>
    %71 = arith.truncf %70 : vector<160x8xf32> to vector<160x8xbf16>
    %72 = vector.shape_cast %71 : vector<160x8xbf16> to vector<10x16x8xbf16>
    %73 = vector.extract_strided_slice %39 {offsets = [0, 0, 0], sizes = [8, 8, 8], strides = [1, 1, 1]} : vector<10x16x8xbf16> to vector<8x8x8xbf16>
    %74 = vector.shape_cast %73 : vector<8x8x8xbf16> to vector<64x8xbf16>
    %75 = vector.extract_strided_slice %50 {offsets = [0, 0, 0], sizes = [8, 8, 8], strides = [1, 1, 1]} : vector<10x16x8xbf16> to vector<8x8x8xbf16>
    %76 = vector.shape_cast %75 : vector<8x8x8xbf16> to vector<64x8xbf16>
    %77 = vector.extract_strided_slice %39 {offsets = [0, 1, 0], sizes = [8, 8, 8], strides = [1, 1, 1]} : vector<10x16x8xbf16> to vector<8x8x8xbf16>
    %78 = vector.shape_cast %77 : vector<8x8x8xbf16> to vector<64x8xbf16>
    %79 = vector.extract_strided_slice %61 {offsets = [0, 0, 0], sizes = [8, 8, 8], strides = [1, 1, 1]} : vector<10x16x8xbf16> to vector<8x8x8xbf16>
    %80 = vector.shape_cast %79 : vector<8x8x8xbf16> to vector<64x8xbf16>
    %81 = vector.extract_strided_slice %72 {offsets = [0, 0, 0], sizes = [8, 8, 8], strides = [1, 1, 1]} : vector<10x16x8xbf16> to vector<8x8x8xbf16>
    %82 = vector.shape_cast %81 : vector<8x8x8xbf16> to vector<64x8xbf16>
    %83 = vector.extract_strided_slice %61 {offsets = [0, 1, 0], sizes = [8, 8, 8], strides = [1, 1, 1]} : vector<10x16x8xbf16> to vector<8x8x8xbf16>
    %84 = vector.shape_cast %83 : vector<8x8x8xbf16> to vector<64x8xbf16>
    %85 = vector.extract_strided_slice %39 {offsets = [1, 0, 0], sizes = [8, 8, 8], strides = [1, 1, 1]} : vector<10x16x8xbf16> to vector<8x8x8xbf16>
    %86 = vector.shape_cast %85 : vector<8x8x8xbf16> to vector<64x8xbf16>
    %87 = vector.extract_strided_slice %50 {offsets = [1, 0, 0], sizes = [8, 8, 8], strides = [1, 1, 1]} : vector<10x16x8xbf16> to vector<8x8x8xbf16>
    %88 = vector.shape_cast %87 : vector<8x8x8xbf16> to vector<64x8xbf16>
    %89 = vector.extract_strided_slice %39 {offsets = [1, 1, 0], sizes = [8, 8, 8], strides = [1, 1, 1]} : vector<10x16x8xbf16> to vector<8x8x8xbf16>
    %90 = vector.shape_cast %89 : vector<8x8x8xbf16> to vector<64x8xbf16>
    %91 = tpu.concatenate %74, %76, %78, %80, %82, %84, %86, %88, %90 in 1 : vector<64x8xbf16>, vector<64x8xbf16>, vector<64x8xbf16>, vector<64x8xbf16>, vector<64x8xbf16>, vector<64x8xbf16>, vector<64x8xbf16>, vector<64x8xbf16>, vector<64x8xbf16> -> vector<64x72xbf16>
    %c0_33 = arith.constant 0 : index
    %c0_34 = arith.constant 0 : index
    %92 = vector.load %arg5[%c0_33, %c0_34] : memref<72x8xbf16, #tpu.memory_space<vmem>>, vector<72x8xbf16>
    %cst_35 = arith.constant dense<0.000000e+00> : vector<64x8xf32>
    %93 = tpu.matmul %91, %92, %cst_35 {dimension_numbers = #tpu.dot_dimension_numbers<[1], [0], [0], [1], [0, 0, 1, 1], [], []>} : vector<64x72xbf16>, vector<72x8xbf16>, vector<64x8xf32> -> vector<64x8xf32>
    %cst_36 = arith.constant 0.000000e+00 : f32
    %94 = vector.broadcast %cst_36 : f32 to vector<64x8xf32>
    %95 = arith.cmpf ogt, %93, %94 : vector<64x8xf32>
    %cst_37 = arith.constant 1.000000e-01 : f32
    %96 = vector.broadcast %cst_37 : f32 to vector<64x8xf32>
    %97 = arith.mulf %96, %93 : vector<64x8xf32>
    %98 = arith.select %95, %93, %97 : vector<64x8xi1>, vector<64x8xf32>
    %99 = arith.truncf %98 : vector<64x8xf32> to vector<64x8xbf16>
    %c0_38 = arith.constant 0 : index
    %c0_39 = arith.constant 0 : index
    %100 = vector.load %arg6[%c0_38, %c0_39] : memref<8x32xbf16, #tpu.memory_space<vmem>>, vector<8x32xbf16>
    %cst_40 = arith.constant dense<0.000000e+00> : vector<64x32xf32>
    %101 = tpu.matmul %99, %100, %cst_40 {dimension_numbers = #tpu.dot_dimension_numbers<[1], [0], [0], [1], [0, 0, 1, 1], [], []>} : vector<64x8xbf16>, vector<8x32xbf16>, vector<64x32xf32> -> vector<64x32xf32>
    %cst_41 = arith.constant 0.000000e+00 : f32
    %102 = vector.broadcast %cst_41 : f32 to vector<64x32xf32>
    %103 = arith.cmpf ogt, %101, %102 : vector<64x32xf32>
    %cst_42 = arith.constant 1.000000e-01 : f32
    %104 = vector.broadcast %cst_42 : f32 to vector<64x32xf32>
    %105 = arith.mulf %104, %101 : vector<64x32xf32>
    %106 = arith.select %103, %101, %105 : vector<64x32xi1>, vector<64x32xf32>
    %107 = vector.extract_strided_slice %27 {offsets = [3, 0, 0, 0], sizes = [1, 10, 16, 4], strides = [1, 1, 1, 1]} : vector<4x10x16x4xbf16> to vector<1x10x16x4xbf16>
    %108 = vector.shape_cast %107 : vector<1x10x16x4xbf16> to vector<10x16x4xbf16>
    %109 = vector.extract_strided_slice %108 {offsets = [0, 0, 0], sizes = [8, 8, 4], strides = [1, 1, 1]} : vector<10x16x4xbf16> to vector<8x8x4xbf16>
    %110 = vector.shape_cast %109 : vector<8x8x4xbf16> to vector<64x4xbf16>
    %c0_43 = arith.constant 0 : index
    %c0_44 = arith.constant 0 : index
    %111 = vector.load %arg7[%c0_43, %c0_44] : memref<4x32xbf16, #tpu.memory_space<vmem>>, vector<4x32xbf16>
    %cst_45 = arith.constant dense<0.000000e+00> : vector<64x32xf32>
    %112 = tpu.matmul %110, %111, %cst_45 {dimension_numbers = #tpu.dot_dimension_numbers<[1], [0], [0], [1], [0, 0, 1, 1], [], []>} : vector<64x4xbf16>, vector<4x32xbf16>, vector<64x32xf32> -> vector<64x32xf32>
    %113 = arith.addf %106, %112 : vector<64x32xf32>
    %cst_46 = arith.constant 0.000000e+00 : f32
    %114 = vector.broadcast %cst_46 : f32 to vector<64x32xf32>
    %115 = arith.cmpf ogt, %113, %114 : vector<64x32xf32>
    %cst_47 = arith.constant 1.000000e-01 : f32
    %116 = vector.broadcast %cst_47 : f32 to vector<64x32xf32>
    %117 = arith.mulf %116, %113 : vector<64x32xf32>
    %118 = arith.select %115, %113, %117 : vector<64x32xi1>, vector<64x32xf32>
    %c0_48 = arith.constant 0 : index
    %c0_49 = arith.constant 0 : index
    %c0_50 = arith.constant 0 : index
    %119 = vector.load %arg8[%c0_48, %c0_49, %c0_50] : memref<1x64x32xf32, #tpu.memory_space<vmem>>, vector<1x64x32xf32>
    %120 = vector.shape_cast %119 : vector<1x64x32xf32> to vector<64x32xf32>
    %121 = vector.shape_cast %118 : vector<64x32xf32> to vector<1x64x32xf32>
    tpu.vector_store %arg8[%c0_48, %c0_49, %c0_50], %121 {strides = array<i32>} : memref<1x64x32xf32, #tpu.memory_space<vmem>>, vector<1x64x32xf32>,
    return
  }
  func.func @transform_1(%arg0: i32, %arg1: i32, %arg2: i32) -> (i32, i32) {
    %c0_i32 = arith.constant 0 : i32
    %c0_i32_0 = arith.constant 0 : i32
    %c0_i32_1 = arith.constant 0 : i32
    return %c0_i32, %c0_i32_0 : i32, i32
  }
  func.func @transform_2(%arg0: i32, %arg1: i32, %arg2: i32) -> (i32, i32) {
    %c0_i32 = arith.constant 0 : i32
    %c0_i32_0 = arith.constant 0 : i32
    %c0_i32_1 = arith.constant 0 : i32
    return %c0_i32, %c0_i32_0 : i32, i32
  }
  func.func @transform_3(%arg0: i32, %arg1: i32, %arg2: i32) -> (i32, i32) {
    %c0_i32 = arith.constant 0 : i32
    %c0_i32_0 = arith.constant 0 : i32
    %c0_i32_1 = arith.constant 0 : i32
    return %c0_i32, %c0_i32_0 : i32, i32
  }
  func.func @transform_4(%arg0: i32, %arg1: i32, %arg2: i32) -> (i32, i32) {
    %c0_i32 = arith.constant 0 : i32
    %c0_i32_0 = arith.constant 0 : i32
    %c0_i32_1 = arith.constant 0 : i32
    return %c0_i32, %c0_i32_0 : i32, i32
  }
  func.func @transform_5(%arg0: i32, %arg1: i32, %arg2: i32) -> (i32, i32, i32) {
    %c1_i32 = arith.constant 1 : i32
    %0 = arith.muli %arg1, %c1_i32 : i32
    %1 = arith.addi %0, %arg2 : i32
    %c0_i32 = arith.constant 0 : i32
    %c0_i32_0 = arith.constant 0 : i32
    return %arg0, %1, %c0_i32 : i32, i32, i32
  }
}

</mosaic_0001>

<llo_original>
// kernel: resnet_bottleneck_block.1
$region0: #{resnet_bottleneck_block.1}
  #allocation0 [shape = 'u32[]', space=smem, size = 0x4, offset = 0x4, fixed_abs, tag = 'smem constant byte address 0x4 - core index']
  #allocation1 [shape = 'u32[72,128]{1,0:T(1,128)}', space=vmem, size = 0x9000, scoped, tag = 'internal scratch']
  #allocation2 [shape = 'bf16[2,4,10,16,4]{4,3,2,1,0:T(8,128)(2,1)}', space=vmem, size = 0x50000, scoped, tag = 'scratch operand']
  #allocation3 [shape = 's32[2]{0}', space=sflag, size = 0x8, scoped, tag = 'scratch operand']
  #allocation6 [shape = 's32[]', space=sflag, size = 0x4, offset = 0, fixed_abs, tag = 'sflag constant byte address 0x0 - dummy sync flag']
  #allocation7 [shape = 's32[]', space=sflag, size = 0x4, offset = 0, fixed_abs, tag = 'sflag constant byte address 0x0 - dummy sync flag']
  %s0 = inlined_call_operand.vmem [shape: bf16[2,4,10,16,4], index: 0, kind: input, shape index: {}]
  %s1 = inlined_call_operand.vmem [shape: bf16[4,8], index: 1, kind: input, shape index: {}]
  %s2 = inlined_call_operand.vmem [shape: bf16[72,8], index: 2, kind: input, shape index: {}]
  %s3 = inlined_call_operand.vmem [shape: bf16[8,32], index: 3, kind: input, shape index: {}]
  %s4 = inlined_call_operand.vmem [shape: bf16[4,32], index: 4, kind: input, shape index: {}]
  %s5 = inlined_call_operand.hbm [shape: f32[2,64,32], index: 5, kind: output, shape index: {}]
  %s6 = sld [smem:[#allocation0]]
  $region95: #{resnet_bottleneck_block.1} parent=0
    _
  %s8 = ssub.s32 1, %s6
  %s9 = scalar_select 0, %s8, %s6
  $region1: #{resnet_bottleneck_block.1} parent=0
    #allocation4 [shape = 'u8[65536]{0}', space=vmem, size = 0x10000, scoped, tag = 'output window, operand 0']
    #allocation5 [shape = 's32[2]{0}', space=sflag, size = 0x8, scoped, tag = 'scoped memory for resnet_bottleneck_block.1']
    %10 = vsyncpa [#allocation5], 0
    %s11 = scalar_lea.sflag [#allocation5], 1
    %12 = vsyncpa %s11, 0
    loop: start=0, step=1, limit=4
    $region2: #{resnet_bottleneck_block.1} parent=1 // loop_pre_header
      _
    $region3: #{resnet_bottleneck_block.1} parent=1 // loop_header
      %s14 = sphi 0, %s18
      %p15 = scmp.ge.s32.totalorder %s14, 4
      %s21 = sphi 0, %s40
      %s22 = sphi 0, %s36
      %s23 = sphi 0, %s32
      %s24 = sphi 0, %s21
      %s25 = sphi 0, %s22
      %s26 = sphi 0, %s23
      %s27 = sphi 0, %s24
      %s28 = sphi 0, %s25
      %s29 = sphi 0, %s26
      %s41 = sphi 0, %s41
      %s43 = sphi 0, %s41
      %s44 = sphi 0, %s43
      %s58 = sphi 0, %s44
      %s62 = sphi 0, %s62
      %s64 = sphi 0, %s62
      %s65 = sphi 0, %s64
      %s79 = sphi 0, %s65
      %s83 = sphi 0, %s83
      %s85 = sphi 0, %s83
      %s86 = sphi 0, %s85
      %s100 = sphi 0, %s86
      %s104 = sphi 0, %s104
      %s106 = sphi 0, %s104
      %s107 = sphi 0, %s106
      %s121 = sphi 0, %s107
      %s131 = sphi 0, %s133
      %s134 = sphi 0, %s131
      %s135 = sphi 0, %s134
      %s151 = sphi 0, %s135
    $region4: #{resnet_bottleneck_block.1} parent=1 // loop_header_branch
      %17 = sbr.rel (%p15) target = $region8
    $region5: #{resnet_bottleneck_block.1} parent=1 // loop_body
      %s19 = ssub.s32 %s14, 1
      %s20 = ssub.s32 %s14, 2
      %s30 = sadd.s32 1, %s23
      %p31 = scmp.ge.s32.totalorder %s30, 1
      %s32 = scalar_select %p31, 0, %s30
      %s33 = sadd.s32 1, %s22
      %s34 = scalar_select %p31, %s33, %s22
      %p35 = scmp.ge.s32.totalorder %s34, 1
      %s36 = scalar_select %p35, 0, %s34
      %s37 = sadd.s32 1, %s21
      %s38 = scalar_select %p35, %s37, %s21
      %p39 = scmp.ge.s32.totalorder %s38, 2
      %s40 = scalar_select %p39, 0, %s38
      %s42 = sadd.s32 %s41, 1
      %p45 = scmp.eq.s32.totalorder %s14, 1
      %p46 = scmp.ne.s32.totalorder %s41, %s43
      %p47 = scmp.eq.s32.totalorder %s14, 0
      %p48 = por %p46, %p47
      %p49 = scmp.ne.s32.totalorder %s41, %s43
      %p50 = scmp.eq.s32.totalorder %s19, 1
      %p51 = por %p49, %p50
      %p52 = scmp.ne.s32.totalorder %s43, %s44
      %p53 = scmp.eq.s32.totalorder %s19, 0
      %p54 = por %p52, %p53
      %p55 = scmp.ne.s32.totalorder %s43, %s44
      %p56 = scmp.eq.s32.totalorder %s20, 1
      %p57 = por %p55, %p56
      %p59 = scmp.ne.s32.totalorder %s44, %s58
      %p60 = scmp.eq.s32.totalorder %s20, 0
      %p61 = por %p59, %p60
      %s63 = sadd.s32 %s62, 1
      %p66 = scmp.eq.s32.totalorder %s14, 1
      %p67 = scmp.ne.s32.totalorder %s62, %s64
      %p68 = scmp.eq.s32.totalorder %s14, 0
      %p69 = por %p67, %p68
      %p70 = scmp.ne.s32.totalorder %s62, %s64
      %p71 = scmp.eq.s32.totalorder %s19, 1
      %p72 = por %p70, %p71
      %p73 = scmp.ne.s32.totalorder %s64, %s65
      %p74 = scmp.eq.s32.totalorder %s19, 0
      %p75 = por %p73, %p74
      %p76 = scmp.ne.s32.totalorder %s64, %s65
      %p77 = scmp.eq.s32.totalorder %s20, 1
      %p78 = por %p76, %p77
      %p80 = scmp.ne.s32.totalorder %s65, %s79
      %p81 = scmp.eq.s32.totalorder %s20, 0
      %p82 = por %p80, %p81
      %s84 = sadd.s32 %s83, 1
      %p87 = scmp.eq.s32.totalorder %s14, 1
      %p88 = scmp.ne.s32.totalorder %s83, %s85
      %p89 = scmp.eq.s32.totalorder %s14, 0
      %p90 = por %p88, %p89
      %p91 = scmp.ne.s32.totalorder %s83, %s85
      %p92 = scmp.eq.s32.totalorder %s19, 1
      %p93 = por %p91, %p92
      %p94 = scmp.ne.s32.totalorder %s85, %s86
      %p95 = scmp.eq.s32.totalorder %s19, 0
      %p96 = por %p94, %p95
      %p97 = scmp.ne.s32.totalorder %s85, %s86
      %p98 = scmp.eq.s32.totalorder %s20, 1
      %p99 = por %p97, %p98
      %p101 = scmp.ne.s32.totalorder %s86, %s100
      %p102 = scmp.eq.s32.totalorder %s20, 0
      %p103 = por %p101, %p102
      %s105 = sadd.s32 %s104, 1
      %p108 = scmp.eq.s32.totalorder %s14, 1
      %p109 = scmp.ne.s32.totalorder %s104, %s106
      %p110 = scmp.eq.s32.totalorder %s14, 0
      %p111 = por %p109, %p110
      %p112 = scmp.ne.s32.totalorder %s104, %s106
      %p113 = scmp.eq.s32.totalorder %s19, 1
      %p114 = por %p112, %p113
      %p115 = scmp.ne.s32.totalorder %s106, %s107
      %p116 = scmp.eq.s32.totalorder %s19, 0
      %p117 = por %p115, %p116
      %p118 = scmp.ne.s32.totalorder %s106, %s107
      %p119 = scmp.eq.s32.totalorder %s20, 1
      %p120 = por %p118, %p119
      %p122 = scmp.ne.s32.totalorder %s107, %s121
      %p123 = scmp.eq.s32.totalorder %s20, 0
      %p124 = por %p122, %p123
      %s125 = sadd.s32 %s22, %s23
      %s126 = sadd.s32 %s36, %s32
      %s127 = ssub.s32 %s21, %s40
      %s128 = ssub.s32 %s125, %s126
      %s129 = sor.u32 %s127, %s128
      %p130 = scmp.eq.s32.totalorder %s129, 0
      %s132 = sadd.s32 %s131, 1
      %s133 = scalar_select %p130, %s131, %s132
      %p136 = pneg %p130
      %p137 = scmp.eq.s32.totalorder %s14, 1
      %p138 = por %p136, %p137
      %p139 = scmp.ne.s32.totalorder %s131, %s134
      %p140 = scmp.eq.s32.totalorder %s14, 0
      %p141 = por %p139, %p140
      %p142 = scmp.ne.s32.totalorder %s131, %s134
      %p143 = scmp.eq.s32.totalorder %s19, 1
      %p144 = por %p142, %p143
      %p145 = scmp.ne.s32.totalorder %s134, %s135
      %p146 = scmp.eq.s32.totalorder %s19, 0
      %p147 = por %p145, %p146
      %p148 = scmp.ne.s32.totalorder %s134, %s135
      %p149 = scmp.eq.s32.totalorder %s20, 1
      %p150 = por %p148, %p149
      %p152 = scmp.ne.s32.totalorder %s135, %s151
      %p153 = scmp.eq.s32.totalorder %s20, 0
      %p154 = por %p152, %p153
      %p155 = scmp.le.s32.totalorder 1, %s14
      %p156 = scmp.lt.s32.totalorder %s14, 3
      %p157 = pnand %p155, %p156
      %p158 = pneg %p157
      // Predicated region
      $region9: #{resnet_bottleneck_block.1} parent=5 // pred_check
        _
      $region10: #{resnet_bottleneck_block.1} parent=5 // pred_check_branch
        %160 = sbr.rel (%p157) target = $region12
      $region11: #{resnet_bottleneck_block.1} parent=5 // pred_region
        %s161 = ssub.s32 %s14, 1
        // Predicated region
        $region13: #{resnet_bottleneck_block.1} parent=11 // pred_check
          %p162 = pneg %p54
        $region14: #{resnet_bottleneck_block.1} parent=11 // pred_check_branch
          %164 = sbr.rel (%p162) target = $region16
        $region15: #{resnet_bottleneck_block.1} parent=11 // pred_region
          _
        $region16: #{resnet_bottleneck_block.1} parent=11 // pred_fallthru
          _
        // Predicated region
        $region17: #{resnet_bottleneck_block.1} parent=11 // pred_check
          %p165 = pneg %p75
        $region18: #{resnet_bottleneck_block.1} parent=11 // pred_check_branch
          %167 = sbr.rel (%p165) target = $region20
        $region19: #{resnet_bottleneck_block.1} parent=11 // pred_region
          _
        $region20: #{resnet_bottleneck_block.1} parent=11 // pred_fallthru
          _
        // Predicated region
        $region21: #{resnet_bottleneck_block.1} parent=11 // pred_check
          %p168 = pneg %p96
        $region22: #{resnet_bottleneck_block.1} parent=11 // pred_check_branch
          %170 = sbr.rel (%p168) target = $region24
        $region23: #{resnet_bottleneck_block.1} parent=11 // pred_region
          _
        $region24: #{resnet_bottleneck_block.1} parent=11 // pred_fallthru
          _
        // Predicated region
        $region25: #{resnet_bottleneck_block.1} parent=11 // pred_check
          %p171 = pneg %p117
        $region26: #{resnet_bottleneck_block.1} parent=11 // pred_check_branch
          %173 = sbr.rel (%p171) target = $region28
        $region27: #{resnet_bottleneck_block.1} parent=11 // pred_region
          _
        $region28: #{resnet_bottleneck_block.1} parent=11 // pred_fallthru
          _
      $region12: #{resnet_bottleneck_block.1} parent=5 // pred_fallthru
        _
      %p174 = scmp.lt.s32.totalorder %s14, 2
      // Predicated region
      $region29: #{resnet_bottleneck_block.1} parent=5 // pred_check
        %p175 = pneg %p174
      $region30: #{resnet_bottleneck_block.1} parent=5 // pred_check_branch
        %177 = sbr.rel (%p175) target = $region32
      $region31: #{resnet_bottleneck_block.1} parent=5 // pred_region
        _
      $region32: #{resnet_bottleneck_block.1} parent=5 // pred_fallthru
        _
      %p178 = scmp.le.s32.totalorder 1, %s14
      %p179 = scmp.lt.s32.totalorder %s14, 3
      %p180 = pnand %p178, %p179
      %p181 = pneg %p180
      // Predicated region
      $region33: #{resnet_bottleneck_block.1} parent=5 // pred_check
        _
      $region34: #{resnet_bottleneck_block.1} parent=5 // pred_check_branch
        %183 = sbr.rel (%p180) target = $region36
      $region35: #{resnet_bottleneck_block.1} parent=5 // pred_region
        %s184 = ssub.s32 %s14, 1
        %p185 = pneg %p54
        %p186 = pneg %p51
        %p187 = pneg %p75
        %p188 = pneg %p72
        %p189 = pneg %p96
        %p190 = pneg %p93
        %p191 = pneg %p117
        %p192 = pneg %p114
        %p193 = pneg %p147
        %p194 = pneg %p144
        %s195 = sand.u32 %s134, 1
        %s196 = scalar_lea.sflag [#allocation5], %s195
        %s197 = sand.u32 %s134, 1
        %s198 = smul.addr %s197, 64
        %s199 = scalar_lea.vmem [#allocation4], %s198
        %s200 = sadd.s32 %s25, %s26
        %s201 = smul.u32 8, %s200
        %s203 = sadd.s32 %s25, %s26
        %p204 = scmp.lt.s32.totalorder %s26, 0
        %s205 = ssub.s32 0, %s26
        %s206 = scalar_select %p204, %s205, %s26
        %s207 = sand.u32 %s206, 1
        %s208 = ssub.s32 0, %s207
        %s209 = scalar_select %p204, %s208, %s207
        %p210 = scmp.ne.s32.totalorder %s209, 0
        %p211 = scmp.lt.s32.totalorder %s209, 0
        %p212 = pnand %p211, %p210
        %p213 = pneg %p212
        %s214 = sadd.s32 %s209, 2
        %s215 = scalar_select %p213, %s214, %s209
        %p216 = scmp.eq.s32.totalorder %s26, 0
        // Predicated region
        $region37: #{resnet_bottleneck_block.1} parent=35 // pred_check
          %p217 = pneg %p216
        $region38: #{resnet_bottleneck_block.1} parent=35 // pred_check_branch
          %219 = sbr.rel (%p217) target = $region40
        $region39: #{resnet_bottleneck_block.1} parent=35 // pred_region
          %s220 = smul.u32 %s203, 8
          %s221 = smul.u32 %s220, 2
          %s222 = smul.u32 %s24, 80
          %s223 = sadd.s32 %s221, %s222
          %s224 = smul.addr %s223, 4
          %s225 = scalar_lea.vmem %s0, %s224
          %s226 = smul.u32 %s215, 80
          %s227 = smul.addr %s226, 4
          %s228 = scalar_lea.vmem [#allocation2], %s227
          %s229 = scalar_lea.sflag [#allocation3], %s215
          // Predicated region
          $region41: #{resnet_bottleneck_block.1} parent=39 // pred_check
            _
          $region42: #{resnet_bottleneck_block.1} parent=39 // pred_check_branch
            %231 = sbr.rel (0) target = $region44
          $region43: #{resnet_bottleneck_block.1} parent=39 // pred_region
            loop: start=0, step=1, limit=1
            $region45: #{resnet_bottleneck_block.1} parent=43 // loop_pre_header
              _
            $region46: #{resnet_bottleneck_block.1} parent=43 // loop_header
              %s233 = sphi 0, %s237
              %p234 = scmp.ge.s32.totalorder %s233, 1
              %s238 = sphi %s225, %s225
              %s239 = sphi %s228, %s228
            $region47: #{resnet_bottleneck_block.1} parent=43 // loop_header_branch
              %236 = sbr.rel (%p234) target = $region51
            $region48: #{resnet_bottleneck_block.1} parent=43 // loop_body
              %v240 = vld [vmem:[%s238] sm:$0xff]
              %241 = vst [vmem:[%s239] sm:$0xff] %v240
              %v242 = vld [vmem:[%s238 + $0x8] sm:$0xff]
              %243 = vst [vmem:[%s239 + $0x8] sm:$0xff] %v242
              %v244 = vld [vmem:[%s238 + $0x10] sm:$0xff]
              %245 = vst [vmem:[%s239 + $0x10] sm:$0xff] %v244
              %v246 = vld [vmem:[%s238 + $0x18] sm:$0xff]
              %247 = vst [vmem:[%s239 + $0x18] sm:$0xff] %v246
              %v248 = vld [vmem:[%s238 + $0x20] sm:$0xff]
              %249 = vst [vmem:[%s239 + $0x20] sm:$0xff] %v248
              %v250 = vld [vmem:[%s238 + $0x28] sm:$0xff]
              %251 = vst [vmem:[%s239 + $0x28] sm:$0xff] %v250
              %v252 = vld [vmem:[%s238 + $0x30] sm:$0xff]
              %253 = vst [vmem:[%s239 + $0x30] sm:$0xff] %v252
              %v254 = vld [vmem:[%s238 + $0x38] sm:$0xff]
              %255 = vst [vmem:[%s239 + $0x38] sm:$0xff] %v254
              %v256 = vld [vmem:[%s238 + $0x40] sm:$0xff]
              %257 = vst [vmem:[%s239 + $0x40] sm:$0xff] %v256
              %v258 = vld [vmem:[%s238 + $0x48] sm:$0xff]
              %259 = vst [vmem:[%s239 + $0x48] sm:$0xff] %v258
              %v260 = vld [vmem:[%s238 + $0x50] sm:$0xff]
              %261 = vst [vmem:[%s239 + $0x50] sm:$0xff] %v260
              %v262 = vld [vmem:[%s238 + $0x58] sm:$0xff]
              %263 = vst [vmem:[%s239 + $0x58] sm:$0xff] %v262
              %v264 = vld [vmem:[%s238 + $0x60] sm:$0xff]
              %265 = vst [vmem:[%s239 + $0x60] sm:$0xff] %v264
              %v266 = vld [vmem:[%s238 + $0x68] sm:$0xff]
              %267 = vst [vmem:[%s239 + $0x68] sm:$0xff] %v266
              %v268 = vld [vmem:[%s238 + $0x70] sm:$0xff]
              %269 = vst [vmem:[%s239 + $0x70] sm:$0xff] %v268
              %v270 = vld [vmem:[%s238 + $0x78] sm:$0xff]
              %271 = vst [vmem:[%s239 + $0x78] sm:$0xff] %v270
              %v272 = vld [vmem:[%s238 + $0x80] sm:$0xff]
              %273 = vst [vmem:[%s239 + $0x80] sm:$0xff] %v272
              %v274 = vld [vmem:[%s238 + $0x88] sm:$0xff]
              %275 = vst [vmem:[%s239 + $0x88] sm:$0xff] %v274
              %v276 = vld [vmem:[%s238 + $0x90] sm:$0xff]
              %277 = vst [vmem:[%s239 + $0x90] sm:$0xff] %v276
              %v278 = vld [vmem:[%s238 + $0x98] sm:$0xff]
              %279 = vst [vmem:[%s239 + $0x98] sm:$0xff] %v278
              %v280 = vld [vmem:[%s238 + $0xa0] sm:$0xff]
              %281 = vst [vmem:[%s239 + $0xa0] sm:$0xff] %v280
              %v282 = vld [vmem:[%s238 + $0xa8] sm:$0xff]
              %283 = vst [vmem:[%s239 + $0xa8] sm:$0xff] %v282
              %v284 = vld [vmem:[%s238 + $0xb0] sm:$0xff]
              %285 = vst [vmem:[%s239 + $0xb0] sm:$0xff] %v284
              %v286 = vld [vmem:[%s238 + $0xb8] sm:$0xff]
              %287 = vst [vmem:[%s239 + $0xb8] sm:$0xff] %v286
              %v288 = vld [vmem:[%s238 + $0xc0] sm:$0xff]
              %289 = vst [vmem:[%s239 + $0xc0] sm:$0xff] %v288
              %v290 = vld [vmem:[%s238 + $0xc8] sm:$0xff]
              %291 = vst [vmem:[%s239 + $0xc8] sm:$0xff] %v290
              %v292 = vld [vmem:[%s238 + $0xd0] sm:$0xff]
              %293 = vst [vmem:[%s239 + $0xd0] sm:$0xff] %v292
              %v294 = vld [vmem:[%s238 + $0xd8] sm:$0xff]
              %295 = vst [vmem:[%s239 + $0xd8] sm:$0xff] %v294
              %v296 = vld [vmem:[%s238 + $0xe0] sm:$0xff]
              %297 = vst [vmem:[%s239 + $0xe0] sm:$0xff] %v296
              %v298 = vld [vmem:[%s238 + $0xe8] sm:$0xff]
              %299 = vst [vmem:[%s239 + $0xe8] sm:$0xff] %v298
              %v300 = vld [vmem:[%s238 + $0xf0] sm:$0xff]
              %301 = vst [vmem:[%s239 + $0xf0] sm:$0xff] %v300
              %v302 = vld [vmem:[%s238 + $0xf8] sm:$0xff]
              %303 = vst [vmem:[%s239 + $0xf8] sm:$0xff] %v302
              %v304 = vld [vmem:[%s238 + $0x100] sm:$0xff]
              %305 = vst [vmem:[%s239 + $0x100] sm:$0xff] %v304
              %v306 = vld [vmem:[%s238 + $0x108] sm:$0xff]
              %307 = vst [vmem:[%s239 + $0x108] sm:$0xff] %v306
              %v308 = vld [vmem:[%s238 + $0x110] sm:$0xff]
              %309 = vst [vmem:[%s239 + $0x110] sm:$0xff] %v308
              %v310 = vld [vmem:[%s238 + $0x118] sm:$0xff]
              %311 = vst [vmem:[%s239 + $0x118] sm:$0xff] %v310
              %v312 = vld [vmem:[%s238 + $0x120] sm:$0xff]
              %313 = vst [vmem:[%s239 + $0x120] sm:$0xff] %v312
              %v314 = vld [vmem:[%s238 + $0x128] sm:$0xff]
              %315 = vst [vmem:[%s239 + $0x128] sm:$0xff] %v314
              %v316 = vld [vmem:[%s238 + $0x130] sm:$0xff]
              %317 = vst [vmem:[%s239 + $0x130] sm:$0xff] %v316
              %v318 = vld [vmem:[%s238 + $0x138] sm:$0xff]
              %319 = vst [vmem:[%s239 + $0x138] sm:$0xff] %v318
            $region49: #{resnet_bottleneck_block.1} parent=43 // loop_footer
              %s237 = sadd.s32 1, %s233
            $region50: #{resnet_bottleneck_block.1} parent=43 // loop_footer_branch
              %232 = sbr.rel target = $region46
            $region51: #{resnet_bottleneck_block.1} parent=43 // loop_exit
              _
          $region44: #{resnet_bottleneck_block.1} parent=39 // pred_fallthru
            _
          // Predicated region
          $region52: #{resnet_bottleneck_block.1} parent=39 // pred_check
            _
          $region53: #{resnet_bottleneck_block.1} parent=39 // pred_check_branch
            %321 = sbr.rel target = $region55
          $region54: #{resnet_bottleneck_block.1} parent=39 // pred_region
            _
          $region55: #{resnet_bottleneck_block.1} parent=39 // pred_fallthru
            _
          // Predicated region
          $region56: #{resnet_bottleneck_block.1} parent=39 // pred_check
            _
          $region57: #{resnet_bottleneck_block.1} parent=39 // pred_check_branch
            %324 = sbr.rel (0) target = $region59
          $region58: #{resnet_bottleneck_block.1} parent=39 // pred_region
            %325 = vsyncadd %s229, 5120
          $region59: #{resnet_bottleneck_block.1} parent=39 // pred_fallthru
            _
        $region40: #{resnet_bottleneck_block.1} parent=35 // pred_fallthru
          _
        %s326 = sadd.s32 %s26, 1
        %p327 = scmp.lt.s32.totalorder %s326, 1
        // Predicated region
        $region60: #{resnet_bottleneck_block.1} parent=35 // pred_check
          %p328 = pneg %p327
        $region61: #{resnet_bottleneck_block.1} parent=35 // pred_check_branch
          %330 = sbr.rel (%p328) target = $region63
        $region62: #{resnet_bottleneck_block.1} parent=35 // pred_region
          %s331 = sadd.s32 %s203, 1
          %s332 = ssub.s32 1, %s215
          %s333 = smul.u32 %s331, 8
          %s334 = smul.u32 %s333, 2
          %s335 = smul.u32 %s24, 80
          %s336 = sadd.s32 %s334, %s335
          %s337 = smul.addr %s336, 4
          %s338 = scalar_lea.vmem %s0, %s337
          %s339 = smul.u32 %s332, 80
          %s340 = smul.addr %s339, 4
          %s341 = scalar_lea.vmem [#allocation2], %s340
          %s342 = scalar_lea.sflag [#allocation3], %s332
          // Predicated region
          $region64: #{resnet_bottleneck_block.1} parent=62 // pred_check
            _
          $region65: #{resnet_bottleneck_block.1} parent=62 // pred_check_branch
            %344 = sbr.rel (0) target = $region67
          $region66: #{resnet_bottleneck_block.1} parent=62 // pred_region
            loop: start=0, step=1, limit=1
            $region68: #{resnet_bottleneck_block.1} parent=66 // loop_pre_header
              _
            $region69: #{resnet_bottleneck_block.1} parent=66 // loop_header
              %s346 = sphi 0, %s350
              %p347 = scmp.ge.s32.totalorder %s346, 1
              %s351 = sphi %s338, %s338
              %s352 = sphi %s341, %s341
            $region70: #{resnet_bottleneck_block.1} parent=66 // loop_header_branch
              %349 = sbr.rel (%p347) target = $region74
            $region71: #{resnet_bottleneck_block.1} parent=66 // loop_body
              %v353 = vld [vmem:[%s351] sm:$0xff]
              %354 = vst [vmem:[%s352] sm:$0xff] %v353
              %v355 = vld [vmem:[%s351 + $0x8] sm:$0xff]
              %356 = vst [vmem:[%s352 + $0x8] sm:$0xff] %v355
              %v357 = vld [vmem:[%s351 + $0x10] sm:$0xff]
              %358 = vst [vmem:[%s352 + $0x10] sm:$0xff] %v357
              %v359 = vld [vmem:[%s351 + $0x18] sm:$0xff]
              %360 = vst [vmem:[%s352 + $0x18] sm:$0xff] %v359
              %v361 = vld [vmem:[%s351 + $0x20] sm:$0xff]
              %362 = vst [vmem:[%s352 + $0x20] sm:$0xff] %v361
              %v363 = vld [vmem:[%s351 + $0x28] sm:$0xff]
              %364 = vst [vmem:[%s352 + $0x28] sm:$0xff] %v363
              %v365 = vld [vmem:[%s351 + $0x30] sm:$0xff]
              %366 = vst [vmem:[%s352 + $0x30] sm:$0xff] %v365
              %v367 = vld [vmem:[%s351 + $0x38] sm:$0xff]
              %368 = vst [vmem:[%s352 + $0x38] sm:$0xff] %v367
              %v369 = vld [vmem:[%s351 + $0x40] sm:$0xff]
              %370 = vst [vmem:[%s352 + $0x40] sm:$0xff] %v369
              %v371 = vld [vmem:[%s351 + $0x48] sm:$0xff]
              %372 = vst [vmem:[%s352 + $0x48] sm:$0xff] %v371
              %v373 = vld [vmem:[%s351 + $0x50] sm:$0xff]
              %374 = vst [vmem:[%s352 + $0x50] sm:$0xff] %v373
              %v375 = vld [vmem:[%s351 + $0x58] sm:$0xff]
              %376 = vst [vmem:[%s352 + $0x58] sm:$0xff] %v375
              %v377 = vld [vmem:[%s351 + $0x60] sm:$0xff]
              %378 = vst [vmem:[%s352 + $0x60] sm:$0xff] %v377
              %v379 = vld [vmem:[%s351 + $0x68] sm:$0xff]
              %380 = vst [vmem:[%s352 + $0x68] sm:$0xff] %v379
              %v381 = vld [vmem:[%s351 + $0x70] sm:$0xff]
              %382 = vst [vmem:[%s352 + $0x70] sm:$0xff] %v381
              %v383 = vld [vmem:[%s351 + $0x78] sm:$0xff]
              %384 = vst [vmem:[%s352 + $0x78] sm:$0xff] %v383
              %v385 = vld [vmem:[%s351 + $0x80] sm:$0xff]
              %386 = vst [vmem:[%s352 + $0x80] sm:$0xff] %v385
              %v387 = vld [vmem:[%s351 + $0x88] sm:$0xff]
              %388 = vst [vmem:[%s352 + $0x88] sm:$0xff] %v387
              %v389 = vld [vmem:[%s351 + $0x90] sm:$0xff]
              %390 = vst [vmem:[%s352 + $0x90] sm:$0xff] %v389
              %v391 = vld [vmem:[%s351 + $0x98] sm:$0xff]
              %392 = vst [vmem:[%s352 + $0x98] sm:$0xff] %v391
              %v393 = vld [vmem:[%s351 + $0xa0] sm:$0xff]
              %394 = vst [vmem:[%s352 + $0xa0] sm:$0xff] %v393
              %v395 = vld [vmem:[%s351 + $0xa8] sm:$0xff]
              %396 = vst [vmem:[%s352 + $0xa8] sm:$0xff] %v395
              %v397 = vld [vmem:[%s351 + $0xb0] sm:$0xff]
              %398 = vst [vmem:[%s352 + $0xb0] sm:$0xff] %v397
              %v399 = vld [vmem:[%s351 + $0xb8] sm:$0xff]
              %400 = vst [vmem:[%s352 + $0xb8] sm:$0xff] %v399
              %v401 = vld [vmem:[%s351 + $0xc0] sm:$0xff]
              %402 = vst [vmem:[%s352 + $0xc0] sm:$0xff] %v401
              %v403 = vld [vmem:[%s351 + $0xc8] sm:$0xff]
              %404 = vst [vmem:[%s352 + $0xc8] sm:$0xff] %v403
              %v405 = vld [vmem:[%s351 + $0xd0] sm:$0xff]
              %406 = vst [vmem:[%s352 + $0xd0] sm:$0xff] %v405
              %v407 = vld [vmem:[%s351 + $0xd8] sm:$0xff]
              %408 = vst [vmem:[%s352 + $0xd8] sm:$0xff] %v407
              %v409 = vld [vmem:[%s351 + $0xe0] sm:$0xff]
              %410 = vst [vmem:[%s352 + $0xe0] sm:$0xff] %v409
              %v411 = vld [vmem:[%s351 + $0xe8] sm:$0xff]
              %412 = vst [vmem:[%s352 + $0xe8] sm:$0xff] %v411
              %v413 = vld [vmem:[%s351 + $0xf0] sm:$0xff]
              %414 = vst [vmem:[%s352 + $0xf0] sm:$0xff] %v413
              %v415 = vld [vmem:[%s351 + $0xf8] sm:$0xff]
              %416 = vst [vmem:[%s352 + $0xf8] sm:$0xff] %v415
              %v417 = vld [vmem:[%s351 + $0x100] sm:$0xff]
              %418 = vst [vmem:[%s352 + $0x100] sm:$0xff] %v417
              %v419 = vld [vmem:[%s351 + $0x108] sm:$0xff]
              %420 = vst [vmem:[%s352 + $0x108] sm:$0xff] %v419
              %v421 = vld [vmem:[%s351 + $0x110] sm:$0xff]
              %422 = vst [vmem:[%s352 + $0x110] sm:$0xff] %v421
              %v423 = vld [vmem:[%s351 + $0x118] sm:$0xff]
              %424 = vst [vmem:[%s352 + $0x118] sm:$0xff] %v423
              %v425 = vld [vmem:[%s351 + $0x120] sm:$0xff]
              %426 = vst [vmem:[%s352 + $0x120] sm:$0xff] %v425
              %v427 = vld [vmem:[%s351 + $0x128] sm:$0xff]
              %428 = vst [vmem:[%s352 + $0x128] sm:$0xff] %v427
              %v429 = vld [vmem:[%s351 + $0x130] sm:$0xff]
              %430 = vst [vmem:[%s352 + $0x130] sm:$0xff] %v429
              %v431 = vld [vmem:[%s351 + $0x138] sm:$0xff]
              %432 = vst [vmem:[%s352 + $0x138] sm:$0xff] %v431
            $region72: #{resnet_bottleneck_block.1} parent=66 // loop_footer
              %s350 = sadd.s32 1, %s346
            $region73: #{resnet_bottleneck_block.1} parent=66 // loop_footer_branch
              %345 = sbr.rel target = $region69
            $region74: #{resnet_bottleneck_block.1} parent=66 // loop_exit
              _
          $region67: #{resnet_bottleneck_block.1} parent=62 // pred_fallthru
            _
          // Predicated region
          $region75: #{resnet_bottleneck_block.1} parent=62 // pred_check
            _
          $region76: #{resnet_bottleneck_block.1} parent=62 // pred_check_branch
            %434 = sbr.rel target = $region78
          $region77: #{resnet_bottleneck_block.1} parent=62 // pred_region
            _
          $region78: #{resnet_bottleneck_block.1} parent=62 // pred_fallthru
            _
          // Predicated region
          $region79: #{resnet_bottleneck_block.1} parent=62 // pred_check
            _
          $region80: #{resnet_bottleneck_block.1} parent=62 // pred_check_branch
            %437 = sbr.rel (0) target = $region82
          $region81: #{resnet_bottleneck_block.1} parent=62 // pred_region
            %438 = vsyncadd %s342, 5120
          $region82: #{resnet_bottleneck_block.1} parent=62 // pred_fallthru
            _
        $region63: #{resnet_bottleneck_block.1} parent=35 // pred_fallthru
          _
        %s439 = scalar_lea.sflag [#allocation3], %s215
        %s440 = smul.u32 4, 4
        %s441 = smul.u32 %s440, 10
        %s442 = smul.u32 %s441, 2
        %s443 = smul.u32 %s442, 1
        %s444 = sshll.u32 %s443, 4
        %445 = dma.done %s439, %s444
        %s446 = smul.u32 %s215, 80
        %s447 = smul.addr %s446, 4
        %s448 = scalar_lea.vmem [#allocation2], %s447
        %v449 = vld [vmem:[%s448] sm:$0xf]
        %v450 = vld [vmem:[%s448 + $0x4] sm:$0xf]
        %v451 = vld [vmem:[%s448 + $0x8] sm:$0xf]
        %v452 = vld [vmem:[%s448 + $0xc] sm:$0xf]
        %v453 = vld [vmem:[%s448 + $0x10] sm:$0xf]
        %v454 = vld [vmem:[%s448 + $0x14] sm:$0xf]
        %v455 = vld [vmem:[%s448 + $0x18] sm:$0xf]
        %v456 = vld [vmem:[%s448 + $0x1c] sm:$0xf]
        %v457 = vld [vmem:[%s448 + $0x20] sm:$0xf]
        %v458 = vld [vmem:[%s448 + $0x24] sm:$0xf]
        %v459 = vld [vmem:[%s448 + $0x28] sm:$0xf]
        %v460 = vld [vmem:[%s448 + $0x2c] sm:$0xf]
        %v461 = vld [vmem:[%s448 + $0x30] sm:$0xf]
        %v462 = vld [vmem:[%s448 + $0x34] sm:$0xf]
        %v463 = vld [vmem:[%s448 + $0x38] sm:$0xf]
        %v464 = vld [vmem:[%s448 + $0x3c] sm:$0xf]
        %v465 = vld [vmem:[%s448 + $0x40] sm:$0xf]
        %v466 = vld [vmem:[%s448 + $0x44] sm:$0xf]
        %v467 = vld [vmem:[%s448 + $0x48] sm:$0xf]
        %v468 = vld [vmem:[%s448 + $0x4c] sm:$0xf]
        %v469 = vld [vmem:[%s448 + $0x50] sm:$0xf]
        %v470 = vld [vmem:[%s448 + $0x54] sm:$0xf]
        %v471 = vld [vmem:[%s448 + $0x58] sm:$0xf]
        %v472 = vld [vmem:[%s448 + $0x5c] sm:$0xf]
        %v473 = vld [vmem:[%s448 + $0x60] sm:$0xf]
        %v474 = vld [vmem:[%s448 + $0x64] sm:$0xf]
        %v475 = vld [vmem:[%s448 + $0x68] sm:$0xf]
        %v476 = vld [vmem:[%s448 + $0x6c] sm:$0xf]
        %v477 = vld [vmem:[%s448 + $0x70] sm:$0xf]
        %v478 = vld [vmem:[%s448 + $0x74] sm:$0xf]
        %v479 = vld [vmem:[%s448 + $0x78] sm:$0xf]
        %v480 = vld [vmem:[%s448 + $0x7c] sm:$0xf]
        %v481 = vld [vmem:[%s448 + $0x80] sm:$0xf]
        %v482 = vld [vmem:[%s448 + $0x84] sm:$0xf]
        %v483 = vld [vmem:[%s448 + $0x88] sm:$0xf]
        %v484 = vld [vmem:[%s448 + $0x8c] sm:$0xf]
        %v485 = vld [vmem:[%s448 + $0x90] sm:$0xf]
        %v486 = vld [vmem:[%s448 + $0x94] sm:$0xf]
        %v487 = vld [vmem:[%s448 + $0x98] sm:$0xf]
        %v488 = vld [vmem:[%s448 + $0x9c] sm:$0xf]
        %v489 = vld [vmem:[%s448 + $0xa0] sm:$0xf]
        %v490 = vld [vmem:[%s448 + $0xa4] sm:$0xf]
        %v491 = vld [vmem:[%s448 + $0xa8] sm:$0xf]
        %v492 = vld [vmem:[%s448 + $0xac] sm:$0xf]
        %v493 = vld [vmem:[%s448 + $0xb0] sm:$0xf]
        %v494 = vld [vmem:[%s448 + $0xb4] sm:$0xf]
        %v495 = vld [vmem:[%s448 + $0xb8] sm:$0xf]
        %v496 = vld [vmem:[%s448 + $0xbc] sm:$0xf]
        %v497 = vld [vmem:[%s448 + $0xc0] sm:$0xf]
        %v498 = vld [vmem:[%s448 + $0xc4] sm:$0xf]
        %v499 = vld [vmem:[%s448 + $0xc8] sm:$0xf]
        %v500 = vld [vmem:[%s448 + $0xcc] sm:$0xf]
        %v501 = vld [vmem:[%s448 + $0xd0] sm:$0xf]
        %v502 = vld [vmem:[%s448 + $0xd4] sm:$0xf]
        %v503 = vld [vmem:[%s448 + $0xd8] sm:$0xf]
        %v504 = vld [vmem:[%s448 + $0xdc] sm:$0xf]
        %v505 = vld [vmem:[%s448 + $0xe0] sm:$0xf]
        %v506 = vld [vmem:[%s448 + $0xe4] sm:$0xf]
        %v507 = vld [vmem:[%s448 + $0xe8] sm:$0xf]
        %v508 = vld [vmem:[%s448 + $0xec] sm:$0xf]
        %v509 = vld [vmem:[%s448 + $0xf0] sm:$0xf]
        %v510 = vld [vmem:[%s448 + $0xf4] sm:$0xf]
        %v511 = vld [vmem:[%s448 + $0xf8] sm:$0xf]
        %v512 = vld [vmem:[%s448 + $0xfc] sm:$0xf]
        %v513 = vld [vmem:[%s448 + $0x100] sm:$0xf]
        %v514 = vld [vmem:[%s448 + $0x104] sm:$0xf]
        %v515 = vld [vmem:[%s448 + $0x108] sm:$0xf]
        %v516 = vld [vmem:[%s448 + $0x10c] sm:$0xf]
        %v517 = vld [vmem:[%s448 + $0x110] sm:$0xf]
        %v518 = vld [vmem:[%s448 + $0x114] sm:$0xf]
        %v519 = vld [vmem:[%s448 + $0x118] sm:$0xf]
        %v520 = vld [vmem:[%s448 + $0x11c] sm:$0xf]
        %v521 = vld [vmem:[%s448 + $0x120] sm:$0xf]
        %v522 = vld [vmem:[%s448 + $0x124] sm:$0xf]
        %v523 = vld [vmem:[%s448 + $0x128] sm:$0xf]
        %v524 = vld [vmem:[%s448 + $0x12c] sm:$0xf]
        %v525 = vld [vmem:[%s448 + $0x130] sm:$0xf]
        %v526 = vld [vmem:[%s448 + $0x134] sm:$0xf]
        %v527 = vld [vmem:[%s448 + $0x138] sm:$0xf]
        %v528 = vld [vmem:[%s448 + $0x13c] sm:$0xf]
        %v529 = vld [vmem:[%s1] sm:$0x3]
        %v550 = vunpack.c.l.b16 %v449
        %v551 = vunpack.c.l.b16 %v450
        %v552 = vunpack.c.l.b16 %v451
        %v553 = vunpack.c.l.b16 %v452
        %v554 = vunpack.c.l.b16 %v453
        %v555 = vunpack.c.l.b16 %v454
        %v556 = vunpack.c.l.b16 %v455
        %v557 = vunpack.c.l.b16 %v456
        %v558 = vunpack.c.l.b16 %v457
        %v559 = vunpack.c.l.b16 %v458
        %v560 = vunpack.c.l.b16 %v459
        %v561 = vunpack.c.l.b16 %v460
        %v562 = vunpack.c.l.b16 %v461
        %v563 = vunpack.c.l.b16 %v462
        %v564 = vunpack.c.l.b16 %v463
        %v565 = vunpack.c.l.b16 %v464
        %v566 = vunpack.c.l.b16 %v465
        %v567 = vunpack.c.l.b16 %v466
        %v568 = vunpack.c.l.b16 %v467
        %v569 = vunpack.c.l.b16 %v468
        %v570 = vpack.c.b16 %v551, %v550
        %v571 = vpack.c.b16 %v553, %v552
        %v572 = vpack.c.b16 %v555, %v554
        %v573 = vpack.c.b16 %v557, %v556
        %v574 = vpack.c.b16 %v559, %v558
        %v575 = vpack.c.b16 %v561, %v560
        %v576 = vpack.c.b16 %v563, %v562
        %v577 = vpack.c.b16 %v565, %v564
        %v578 = vpack.c.b16 %v567, %v566
        %v579 = vpack.c.b16 %v569, %v568
        %vm580 = vcmask 31744
        %v582 = vsel %vm580, %v570, 0
        %v585 = vsel %vm580, %v571, 0
        %v588 = vsel %vm580, %v572, 0
        %v591 = vsel %vm580, %v573, 0
        %v594 = vsel %vm580, %v574, 0
        %v597 = vsel %vm580, %v575, 0
        %v600 = vsel %vm580, %v576, 0
        %v603 = vsel %vm580, %v577, 0
        %v606 = vsel %vm580, %v578, 0
        %v609 = vsel %vm580, %v579, 0
        %vm611 = vcmask 1041408
        %v613 = vsel %vm611, %v529, 0
        %615 = vmatpush.bf16.msra.mxu0 0
        %616 = vmatpush.bf16.msra.mxu0 0
        %617 = vmatpush.bf16.msra.mxu0 0
        %618 = vmatpush.bf16.msra.mxu0 0
        %619 = vmatpush.bf16.msra.mxu0 0
        %620 = vmatpush.bf16.msra.mxu0 0
        %621 = vmatpush.bf16.msra.mxu0 0
        %622 = vmatpush.bf16.msra.mxu0 %v613
        %623 = vmatmul.bf16.gmra.mxu0 %v582
        %v624 = vpop.f32.mrf.mxu0
        %v625 = vadd.f32 0.0, %v624
        %v626 = vpop.f32.mrf.mxu0
        %v627 = vadd.f32 0.0, %v626
        %628 = vmatmul.bf16.gmra.mxu0 %v585
        %v629 = vpop.f32.mrf.mxu0
        %v630 = vadd.f32 0.0, %v629
        %v631 = vpop.f32.mrf.mxu0
        %v632 = vadd.f32 0.0, %v631
        %633 = vmatmul.bf16.gmra.mxu0 %v588
        %v634 = vpop.f32.mrf.mxu0
        %v635 = vadd.f32 0.0, %v634
        %v636 = vpop.f32.mrf.mxu0
        %v637 = vadd.f32 0.0, %v636
        %638 = vmatmul.bf16.gmra.mxu0 %v591
        %v639 = vpop.f32.mrf.mxu0
        %v640 = vadd.f32 0.0, %v639
        %v641 = vpop.f32.mrf.mxu0
        %v642 = vadd.f32 0.0, %v641
        %643 = vmatmul.bf16.gmra.mxu0 %v594
        %v644 = vpop.f32.mrf.mxu0
        %v645 = vadd.f32 0.0, %v644
        %v646 = vpop.f32.mrf.mxu0
        %v647 = vadd.f32 0.0, %v646
        %648 = vmatmul.bf16.gmra.mxu0 %v597
        %v649 = vpop.f32.mrf.mxu0
        %v650 = vadd.f32 0.0, %v649
        %v651 = vpop.f32.mrf.mxu0
        %v652 = vadd.f32 0.0, %v651
        %653 = vmatmul.bf16.gmra.mxu0 %v600
        %v654 = vpop.f32.mrf.mxu0
        %v655 = vadd.f32 0.0, %v654
        %v656 = vpop.f32.mrf.mxu0
        %v657 = vadd.f32 0.0, %v656
        %658 = vmatmul.bf16.gmra.mxu0 %v603
        %v659 = vpop.f32.mrf.mxu0
        %v660 = vadd.f32 0.0, %v659
        %v661 = vpop.f32.mrf.mxu0
        %v662 = vadd.f32 0.0, %v661
        %663 = vmatmul.bf16.gmra.mxu0 %v606
        %v664 = vpop.f32.mrf.mxu0
        %v665 = vadd.f32 0.0, %v664
        %v666 = vpop.f32.mrf.mxu0
        %v667 = vadd.f32 0.0, %v666
        %668 = vmatmul.bf16.gmra.mxu0 %v609
        %v669 = vpop.f32.mrf.mxu0
        %v670 = vpop.f32.mrf.mxu0
        %671 = vdwg.mxu0
        %vm672 = vcmp.gt.f32.partialorder %v625, 0.0
        %vm673 = vcmp.gt.f32.partialorder %v627, 0.0
        %vm674 = vcmp.gt.f32.partialorder %v630, 0.0
        %vm675 = vcmp.gt.f32.partialorder %v632, 0.0
        %vm676 = vcmp.gt.f32.partialorder %v635, 0.0
        %vm677 = vcmp.gt.f32.partialorder %v637, 0.0
        %vm678 = vcmp.gt.f32.partialorder %v640, 0.0
        %vm679 = vcmp.gt.f32.partialorder %v642, 0.0
        %vm680 = vcmp.gt.f32.partialorder %v645, 0.0
        %vm681 = vcmp.gt.f32.partialorder %v647, 0.0
        %vm682 = vcmp.gt.f32.partialorder %v650, 0.0
        %vm683 = vcmp.gt.f32.partialorder %v652, 0.0
        %vm684 = vcmp.gt.f32.partialorder %v655, 0.0
        %vm685 = vcmp.gt.f32.partialorder %v657, 0.0
        %vm686 = vcmp.gt.f32.partialorder %v660, 0.0
        %vm687 = vcmp.gt.f32.partialorder %v662, 0.0
        %vm688 = vcmp.gt.f32.partialorder %v665, 0.0
        %vm689 = vcmp.gt.f32.partialorder %v667, 0.0
        %v690 = vmul.f32 %v625, 0.1
        %v691 = vmul.f32 %v627, 0.1
        %v692 = vmul.f32 %v630, 0.1
        %v693 = vmul.f32 %v632, 0.1
        %v694 = vmul.f32 %v635, 0.1
        %v695 = vmul.f32 %v637, 0.1
        %v696 = vmul.f32 %v640, 0.1
        %v697 = vmul.f32 %v642, 0.1
        %v698 = vmul.f32 %v645, 0.1
        %v699 = vmul.f32 %v647, 0.1
        %v700 = vmul.f32 %v650, 0.1
        %v701 = vmul.f32 %v652, 0.1
        %v702 = vmul.f32 %v655, 0.1
        %v703 = vmul.f32 %v657, 0.1
        %v704 = vmul.f32 %v660, 0.1
        %v705 = vmul.f32 %v662, 0.1
        %v706 = vmul.f32 %v665, 0.1
        %v707 = vmul.f32 %v667, 0.1
        %v708 = vsel %vm672, %v625, %v690
        %v709 = vsel %vm673, %v627, %v691
        %v710 = vsel %vm674, %v630, %v692
        %v711 = vsel %vm675, %v632, %v693
        %v712 = vsel %vm676, %v635, %v694
        %v713 = vsel %vm677, %v637, %v695
        %v714 = vsel %vm678, %v640, %v696
        %v715 = vsel %vm679, %v642, %v697
        %v716 = vsel %vm680, %v645, %v698
        %v717 = vsel %vm681, %v647, %v699
        %v718 = vsel %vm682, %v650, %v700
        %v719 = vsel %vm683, %v652, %v701
        %v720 = vsel %vm684, %v655, %v702
        %v721 = vsel %vm685, %v657, %v703
        %v722 = vsel %vm686, %v660, %v704
        %v723 = vsel %vm687, %v662, %v705
        %v724 = vsel %vm688, %v665, %v706
        %v725 = vsel %vm689, %v667, %v707
        %v726 = vpack.c.bf16 %v708, %v708
        %v727 = vpack.c.bf16 %v709, %v709
        %v728 = vpack.c.bf16 %v710, %v710
        %v729 = vpack.c.bf16 %v711, %v711
        %v730 = vpack.c.bf16 %v712, %v712
        %v731 = vpack.c.bf16 %v713, %v713
        %v732 = vpack.c.bf16 %v714, %v714
        %v733 = vpack.c.bf16 %v715, %v715
        %v734 = vpack.c.bf16 %v716, %v716
        %v735 = vpack.c.bf16 %v717, %v717
        %v736 = vpack.c.bf16 %v718, %v718
        %v737 = vpack.c.bf16 %v719, %v719
        %v738 = vpack.c.bf16 %v720, %v720
        %v739 = vpack.c.bf16 %v721, %v721
        %v740 = vpack.c.bf16 %v722, %v722
        %v741 = vpack.c.bf16 %v723, %v723
        %v742 = vpack.c.bf16 %v724, %v724
        %v743 = vpack.c.bf16 %v725, %v725
        %v764 = vunpack.c.l.b16 %v469
        %v765 = vunpack.c.l.b16 %v470
        %v766 = vunpack.c.l.b16 %v471
        %v767 = vunpack.c.l.b16 %v472
        %v768 = vunpack.c.l.b16 %v473
        %v769 = vunpack.c.l.b16 %v474
        %v770 = vunpack.c.l.b16 %v475
        %v771 = vunpack.c.l.b16 %v476
        %v772 = vunpack.c.l.b16 %v477
        %v773 = vunpack.c.l.b16 %v478
        %v774 = vunpack.c.l.b16 %v479
        %v775 = vunpack.c.l.b16 %v480
        %v776 = vunpack.c.l.b16 %v481
        %v777 = vunpack.c.l.b16 %v482
        %v778 = vunpack.c.l.b16 %v483
        %v779 = vunpack.c.l.b16 %v484
        %v780 = vunpack.c.l.b16 %v485
        %v781 = vunpack.c.l.b16 %v486
        %v782 = vunpack.c.l.b16 %v487
        %v783 = vunpack.c.l.b16 %v488
        %v784 = vpack.c.b16 %v765, %v764
        %v785 = vpack.c.b16 %v767, %v766
        %v786 = vpack.c.b16 %v769, %v768
        %v787 = vpack.c.b16 %v771, %v770
        %v788 = vpack.c.b16 %v773, %v772
        %v789 = vpack.c.b16 %v775, %v774
        %v790 = vpack.c.b16 %v777, %v776
        %v791 = vpack.c.b16 %v779, %v778
        %v792 = vpack.c.b16 %v781, %v780
        %v793 = vpack.c.b16 %v783, %v782
        %v795 = vsel %vm580, %v784, 0
        %v798 = vsel %vm580, %v785, 0
        %v801 = vsel %vm580, %v786, 0
        %v804 = vsel %vm580, %v787, 0
        %v807 = vsel %vm580, %v788, 0
        %v810 = vsel %vm580, %v789, 0
        %v813 = vsel %vm580, %v790, 0
        %v816 = vsel %vm580, %v791, 0
        %v819 = vsel %vm580, %v792, 0
        %v822 = vsel %vm580, %v793, 0
        %824 = vmatpush.bf16.msra.mxu0 0
        %825 = vmatpush.bf16.msra.mxu0 0
        %826 = vmatpush.bf16.msra.mxu0 0
        %827 = vmatpush.bf16.msra.mxu0 0
        %828 = vmatpush.bf16.msra.mxu0 0
        %829 = vmatpush.bf16.msra.mxu0 0
        %830 = vmatpush.bf16.msra.mxu0 0
        %831 = vmatpush.bf16.msra.mxu0 %v613
        %832 = vmatmul.bf16.gmra.mxu0 %v795
        %v833 = vpop.f32.mrf.mxu0
        %v834 = vadd.f32 0.0, %v833
        %v835 = vpop.f32.mrf.mxu0
        %836 = vmatmul.bf16.gmra.mxu0 %v798
        %v837 = vpop.f32.mrf.mxu0
        %v838 = vadd.f32 0.0, %v837
        %v839 = vpop.f32.mrf.mxu0
        %840 = vmatmul.bf16.gmra.mxu0 %v801
        %v841 = vpop.f32.mrf.mxu0
        %v842 = vadd.f32 0.0, %v841
        %v843 = vpop.f32.mrf.mxu0
        %844 = vmatmul.bf16.gmra.mxu0 %v804
        %v845 = vpop.f32.mrf.mxu0
        %v846 = vadd.f32 0.0, %v845
        %v847 = vpop.f32.mrf.mxu0
        %848 = vmatmul.bf16.gmra.mxu0 %v807
        %v849 = vpop.f32.mrf.mxu0
        %v850 = vadd.f32 0.0, %v849
        %v851 = vpop.f32.mrf.mxu0
        %852 = vmatmul.bf16.gmra.mxu0 %v810
        %v853 = vpop.f32.mrf.mxu0
        %v854 = vadd.f32 0.0, %v853
        %v855 = vpop.f32.mrf.mxu0
        %856 = vmatmul.bf16.gmra.mxu0 %v813
        %v857 = vpop.f32.mrf.mxu0
        %v858 = vadd.f32 0.0, %v857
        %v859 = vpop.f32.mrf.mxu0
        %860 = vmatmul.bf16.gmra.mxu0 %v816
        %v861 = vpop.f32.mrf.mxu0
        %v862 = vadd.f32 0.0, %v861
        %v863 = vpop.f32.mrf.mxu0
        %864 = vmatmul.bf16.gmra.mxu0 %v819
        %v865 = vpop.f32.mrf.mxu0
        %v866 = vadd.f32 0.0, %v865
        %v867 = vpop.f32.mrf.mxu0
        %868 = vmatmul.bf16.gmra.mxu0 %v822
        %v869 = vpop.f32.mrf.mxu0
        %v870 = vpop.f32.mrf.mxu0
        %871 = vdwg.mxu0
        %vm872 = vcmp.gt.f32.partialorder %v834, 0.0
        %vm873 = vcmp.gt.f32.partialorder %v838, 0.0
        %vm874 = vcmp.gt.f32.partialorder %v842, 0.0
        %vm875 = vcmp.gt.f32.partialorder %v846, 0.0
        %vm876 = vcmp.gt.f32.partialorder %v850, 0.0
        %vm877 = vcmp.gt.f32.partialorder %v854, 0.0
        %vm878 = vcmp.gt.f32.partialorder %v858, 0.0
        %vm879 = vcmp.gt.f32.partialorder %v862, 0.0
        %vm880 = vcmp.gt.f32.partialorder %v866, 0.0
        %v881 = vmul.f32 %v834, 0.1
        %v882 = vmul.f32 %v838, 0.1
        %v883 = vmul.f32 %v842, 0.1
        %v884 = vmul.f32 %v846, 0.1
        %v885 = vmul.f32 %v850, 0.1
        %v886 = vmul.f32 %v854, 0.1
        %v887 = vmul.f32 %v858, 0.1
        %v888 = vmul.f32 %v862, 0.1
        %v889 = vmul.f32 %v866, 0.1
        %v890 = vsel %vm872, %v834, %v881
        %v891 = vsel %vm873, %v838, %v882
        %v892 = vsel %vm874, %v842, %v883
        %v893 = vsel %vm875, %v846, %v884
        %v894 = vsel %vm876, %v850, %v885
        %v895 = vsel %vm877, %v854, %v886
        %v896 = vsel %vm878, %v858, %v887
        %v897 = vsel %vm879, %v862, %v888
        %v898 = vsel %vm880, %v866, %v889
        %v899 = vpack.c.bf16 %v890, %v890
        %v900 = vpack.c.bf16 %v891, %v891
        %v901 = vpack.c.bf16 %v892, %v892
        %v902 = vpack.c.bf16 %v893, %v893
        %v903 = vpack.c.bf16 %v894, %v894
        %v904 = vpack.c.bf16 %v895, %v895
        %v905 = vpack.c.bf16 %v896, %v896
        %v906 = vpack.c.bf16 %v897, %v897
        %v907 = vpack.c.bf16 %v898, %v898
        %v928 = vunpack.c.l.b16 %v489
        %v929 = vunpack.c.l.b16 %v490
        %v930 = vunpack.c.l.b16 %v491
        %v931 = vunpack.c.l.b16 %v492
        %v932 = vunpack.c.l.b16 %v493
        %v933 = vunpack.c.l.b16 %v494
        %v934 = vunpack.c.l.b16 %v495
        %v935 = vunpack.c.l.b16 %v496
        %v936 = vunpack.c.l.b16 %v497
        %v937 = vunpack.c.l.b16 %v498
        %v938 = vunpack.c.l.b16 %v499
        %v939 = vunpack.c.l.b16 %v500
        %v940 = vunpack.c.l.b16 %v501
        %v941 = vunpack.c.l.b16 %v502
        %v942 = vunpack.c.l.b16 %v503
        %v943 = vunpack.c.l.b16 %v504
        %v944 = vunpack.c.l.b16 %v505
        %v945 = vunpack.c.l.b16 %v506
        %v946 = vunpack.c.l.b16 %v507
        %v947 = vunpack.c.l.b16 %v508
        %v948 = vpack.c.b16 %v929, %v928
        %v949 = vpack.c.b16 %v931, %v930
        %v950 = vpack.c.b16 %v933, %v932
        %v951 = vpack.c.b16 %v935, %v934
        %v952 = vpack.c.b16 %v937, %v936
        %v953 = vpack.c.b16 %v939, %v938
        %v954 = vpack.c.b16 %v941, %v940
        %v955 = vpack.c.b16 %v943, %v942
        %v956 = vpack.c.b16 %v945, %v944
        %v957 = vpack.c.b16 %v947, %v946
        %v959 = vsel %vm580, %v948, 0
        %v962 = vsel %vm580, %v949, 0
        %v965 = vsel %vm580, %v950, 0
        %v968 = vsel %vm580, %v951, 0
        %v971 = vsel %vm580, %v952, 0
        %v974 = vsel %vm580, %v953, 0
        %v977 = vsel %vm580, %v954, 0
        %v980 = vsel %vm580, %v955, 0
        %v983 = vsel %vm580, %v956, 0
        %v986 = vsel %vm580, %v957, 0
        %988 = vmatpush.bf16.msra.mxu0 0
        %989 = vmatpush.bf16.msra.mxu0 0
        %990 = vmatpush.bf16.msra.mxu0 0
        %991 = vmatpush.bf16.msra.mxu0 0
        %992 = vmatpush.bf16.msra.mxu0 0
        %993 = vmatpush.bf16.msra.mxu0 0
        %994 = vmatpush.bf16.msra.mxu0 0
        %995 = vmatpush.bf16.msra.mxu0 %v613
        %996 = vmatmul.bf16.gmra.mxu0 %v959
        %v997 = vpop.f32.mrf.mxu0
        %v998 = vadd.f32 0.0, %v997
        %v999 = vpop.f32.mrf.mxu0
        %v1000 = vadd.f32 0.0, %v999
        %1001 = vmatmul.bf16.gmra.mxu0 %v962
        %v1002 = vpop.f32.mrf.mxu0
        %v1003 = vadd.f32 0.0, %v1002
        %v1004 = vpop.f32.mrf.mxu0
        %v1005 = vadd.f32 0.0, %v1004
        %1006 = vmatmul.bf16.gmra.mxu0 %v965
        %v1007 = vpop.f32.mrf.mxu0
        %v1008 = vadd.f32 0.0, %v1007
        %v1009 = vpop.f32.mrf.mxu0
        %v1010 = vadd.f32 0.0, %v1009
        %1011 = vmatmul.bf16.gmra.mxu0 %v968
        %v1012 = vpop.f32.mrf.mxu0
        %v1013 = vadd.f32 0.0, %v1012
        %v1014 = vpop.f32.mrf.mxu0
        %v1015 = vadd.f32 0.0, %v1014
        %1016 = vmatmul.bf16.gmra.mxu0 %v971
        %v1017 = vpop.f32.mrf.mxu0
        %v1018 = vadd.f32 0.0, %v1017
        %v1019 = vpop.f32.mrf.mxu0
        %v1020 = vadd.f32 0.0, %v1019
        %1021 = vmatmul.bf16.gmra.mxu0 %v974
        %v1022 = vpop.f32.mrf.mxu0
        %v1023 = vadd.f32 0.0, %v1022
        %v1024 = vpop.f32.mrf.mxu0
        %v1025 = vadd.f32 0.0, %v1024
        %1026 = vmatmul.bf16.gmra.mxu0 %v977
        %v1027 = vpop.f32.mrf.mxu0
        %v1028 = vadd.f32 0.0, %v1027
        %v1029 = vpop.f32.mrf.mxu0
        %v1030 = vadd.f32 0.0, %v1029
        %1031 = vmatmul.bf16.gmra.mxu0 %v980
        %v1032 = vpop.f32.mrf.mxu0
        %v1033 = vadd.f32 0.0, %v1032
        %v1034 = vpop.f32.mrf.mxu0
        %v1035 = vadd.f32 0.0, %v1034
        %1036 = vmatmul.bf16.gmra.mxu0 %v983
        %v1037 = vpop.f32.mrf.mxu0
        %v1038 = vpop.f32.mrf.mxu0
        %1039 = vmatmul.bf16.gmra.mxu0 %v986
        %v1040 = vpop.f32.mrf.mxu0
        %v1041 = vpop.f32.mrf.mxu0
        %1042 = vdwg.mxu0
        %vm1043 = vcmp.gt.f32.partialorder %v998, 0.0
        %vm1044 = vcmp.gt.f32.partialorder %v1000, 0.0
        %vm1045 = vcmp.gt.f32.partialorder %v1003, 0.0
        %vm1046 = vcmp.gt.f32.partialorder %v1005, 0.0
        %vm1047 = vcmp.gt.f32.partialorder %v1008, 0.0
        %vm1048 = vcmp.gt.f32.partialorder %v1010, 0.0
        %vm1049 = vcmp.gt.f32.partialorder %v1013, 0.0
        %vm1050 = vcmp.gt.f32.partialorder %v1015, 0.0
        %vm1051 = vcmp.gt.f32.partialorder %v1018, 0.0
        %vm1052 = vcmp.gt.f32.partialorder %v1020, 0.0
        %vm1053 = vcmp.gt.f32.partialorder %v1023, 0.0
        %vm1054 = vcmp.gt.f32.partialorder %v1025, 0.0
        %vm1055 = vcmp.gt.f32.partialorder %v1028, 0.0
        %vm1056 = vcmp.gt.f32.partialorder %v1030, 0.0
        %vm1057 = vcmp.gt.f32.partialorder %v1033, 0.0
        %vm1058 = vcmp.gt.f32.partialorder %v1035, 0.0
        %v1059 = vmul.f32 %v998, 0.1
        %v1060 = vmul.f32 %v1000, 0.1
        %v1061 = vmul.f32 %v1003, 0.1
        %v1062 = vmul.f32 %v1005, 0.1
        %v1063 = vmul.f32 %v1008, 0.1
        %v1064 = vmul.f32 %v1010, 0.1
        %v1065 = vmul.f32 %v1013, 0.1
        %v1066 = vmul.f32 %v1015, 0.1
        %v1067 = vmul.f32 %v1018, 0.1
        %v1068 = vmul.f32 %v1020, 0.1
        %v1069 = vmul.f32 %v1023, 0.1
        %v1070 = vmul.f32 %v1025, 0.1
        %v1071 = vmul.f32 %v1028, 0.1
        %v1072 = vmul.f32 %v1030, 0.1
        %v1073 = vmul.f32 %v1033, 0.1
        %v1074 = vmul.f32 %v1035, 0.1
        %v1075 = vsel %vm1043, %v998, %v1059
        %v1076 = vsel %vm1044, %v1000, %v1060
        %v1077 = vsel %vm1045, %v1003, %v1061
        %v1078 = vsel %vm1046, %v1005, %v1062
        %v1079 = vsel %vm1047, %v1008, %v1063
        %v1080 = vsel %vm1048, %v1010, %v1064
        %v1081 = vsel %vm1049, %v1013, %v1065
        %v1082 = vsel %vm1050, %v1015, %v1066
        %v1083 = vsel %vm1051, %v1018, %v1067
        %v1084 = vsel %vm1052, %v1020, %v1068
        %v1085 = vsel %vm1053, %v1023, %v1069
        %v1086 = vsel %vm1054, %v1025, %v1070
        %v1087 = vsel %vm1055, %v1028, %v1071
        %v1088 = vsel %vm1056, %v1030, %v1072
        %v1089 = vsel %vm1057, %v1033, %v1073
        %v1090 = vsel %vm1058, %v1035, %v1074
        %v1091 = vpack.c.bf16 %v1075, %v1075
        %v1092 = vpack.c.bf16 %v1076, %v1076
        %v1093 = vpack.c.bf16 %v1077, %v1077
        %v1094 = vpack.c.bf16 %v1078, %v1078
        %v1095 = vpack.c.bf16 %v1079, %v1079
        %v1096 = vpack.c.bf16 %v1080, %v1080
        %v1097 = vpack.c.bf16 %v1081, %v1081
        %v1098 = vpack.c.bf16 %v1082, %v1082
        %v1099 = vpack.c.bf16 %v1083, %v1083
        %v1100 = vpack.c.bf16 %v1084, %v1084
        %v1101 = vpack.c.bf16 %v1085, %v1085
        %v1102 = vpack.c.bf16 %v1086, %v1086
        %v1103 = vpack.c.bf16 %v1087, %v1087
        %v1104 = vpack.c.bf16 %v1088, %v1088
        %v1105 = vpack.c.bf16 %v1089, %v1089
        %v1106 = vpack.c.bf16 %v1090, %v1090
        %v1127 = vunpack.c.l.b16 %v509
        %v1128 = vunpack.c.l.b16 %v510
        %v1129 = vunpack.c.l.b16 %v511
        %v1130 = vunpack.c.l.b16 %v512
        %v1131 = vunpack.c.l.b16 %v513
        %v1132 = vunpack.c.l.b16 %v514
        %v1133 = vunpack.c.l.b16 %v515
        %v1134 = vunpack.c.l.b16 %v516
        %v1135 = vunpack.c.l.b16 %v517
        %v1136 = vunpack.c.l.b16 %v518
        %v1137 = vunpack.c.l.b16 %v519
        %v1138 = vunpack.c.l.b16 %v520
        %v1139 = vunpack.c.l.b16 %v521
        %v1140 = vunpack.c.l.b16 %v522
        %v1141 = vunpack.c.l.b16 %v523
        %v1142 = vunpack.c.l.b16 %v524
        %v1143 = vunpack.c.l.b16 %v525
        %v1144 = vunpack.c.l.b16 %v526
        %v1145 = vunpack.c.l.b16 %v527
        %v1146 = vunpack.c.l.b16 %v528
        %v1147 = vpack.c.b16 %v1128, %v1127
        %v1148 = vpack.c.b16 %v1130, %v1129
        %v1149 = vpack.c.b16 %v1132, %v1131
        %v1150 = vpack.c.b16 %v1134, %v1133
        %v1151 = vpack.c.b16 %v1136, %v1135
        %v1152 = vpack.c.b16 %v1138, %v1137
        %v1153 = vpack.c.b16 %v1140, %v1139
        %v1154 = vpack.c.b16 %v1142, %v1141
        %v1155 = vpack.c.b16 %v1144, %v1143
        %v1156 = vpack.c.b16 %v1146, %v1145
        %v1158 = vsel %vm580, %v1147, 0
        %v1161 = vsel %vm580, %v1148, 0
        %v1164 = vsel %vm580, %v1149, 0
        %v1167 = vsel %vm580, %v1150, 0
        %v1170 = vsel %vm580, %v1151, 0
        %v1173 = vsel %vm580, %v1152, 0
        %v1176 = vsel %vm580, %v1153, 0
        %v1179 = vsel %vm580, %v1154, 0
        %v1182 = vsel %vm580, %v1155, 0
        %v1185 = vsel %vm580, %v1156, 0
        %1187 = vmatpush.bf16.msra.mxu0 0
        %1188 = vmatpush.bf16.msra.mxu0 0
        %1189 = vmatpush.bf16.msra.mxu0 0
        %1190 = vmatpush.bf16.msra.mxu0 0
        %1191 = vmatpush.bf16.msra.mxu0 0
        %1192 = vmatpush.bf16.msra.mxu0 0
        %1193 = vmatpush.bf16.msra.mxu0 0
        %1194 = vmatpush.bf16.msra.mxu0 %v613
        %1195 = vmatmul.bf16.gmra.mxu0 %v1158
        %v1196 = vpop.f32.mrf.mxu0
        %v1197 = vadd.f32 0.0, %v1196
        %v1198 = vpop.f32.mrf.mxu0
        %1199 = vmatmul.bf16.gmra.mxu0 %v1161
        %v1200 = vpop.f32.mrf.mxu0
        %v1201 = vadd.f32 0.0, %v1200
        %v1202 = vpop.f32.mrf.mxu0
        %1203 = vmatmul.bf16.gmra.mxu0 %v1164
        %v1204 = vpop.f32.mrf.mxu0
        %v1205 = vadd.f32 0.0, %v1204
        %v1206 = vpop.f32.mrf.mxu0
        %1207 = vmatmul.bf16.gmra.mxu0 %v1167
        %v1208 = vpop.f32.mrf.mxu0
        %v1209 = vadd.f32 0.0, %v1208
        %v1210 = vpop.f32.mrf.mxu0
        %1211 = vmatmul.bf16.gmra.mxu0 %v1170
        %v1212 = vpop.f32.mrf.mxu0
        %v1213 = vadd.f32 0.0, %v1212
        %v1214 = vpop.f32.mrf.mxu0
        %1215 = vmatmul.bf16.gmra.mxu0 %v1173
        %v1216 = vpop.f32.mrf.mxu0
        %v1217 = vadd.f32 0.0, %v1216
        %v1218 = vpop.f32.mrf.mxu0
        %1219 = vmatmul.bf16.gmra.mxu0 %v1176
        %v1220 = vpop.f32.mrf.mxu0
        %v1221 = vadd.f32 0.0, %v1220
        %v1222 = vpop.f32.mrf.mxu0
        %1223 = vmatmul.bf16.gmra.mxu0 %v1179
        %v1224 = vpop.f32.mrf.mxu0
        %v1225 = vadd.f32 0.0, %v1224
        %v1226 = vpop.f32.mrf.mxu0
        %1227 = vmatmul.bf16.gmra.mxu0 %v1182
        %v1228 = vpop.f32.mrf.mxu0
        %v1229 = vpop.f32.mrf.mxu0
        %1230 = vmatmul.bf16.gmra.mxu0 %v1185
        %v1231 = vpop.f32.mrf.mxu0
        %v1232 = vpop.f32.mrf.mxu0
        %1233 = vdwg.mxu0
        %vm1234 = vcmp.gt.f32.partialorder %v1197, 0.0
        %vm1235 = vcmp.gt.f32.partialorder %v1201, 0.0
        %vm1236 = vcmp.gt.f32.partialorder %v1205, 0.0
        %vm1237 = vcmp.gt.f32.partialorder %v1209, 0.0
        %vm1238 = vcmp.gt.f32.partialorder %v1213, 0.0
        %vm1239 = vcmp.gt.f32.partialorder %v1217, 0.0
        %vm1240 = vcmp.gt.f32.partialorder %v1221, 0.0
        %vm1241 = vcmp.gt.f32.partialorder %v1225, 0.0
        %v1242 = vmul.f32 %v1197, 0.1
        %v1243 = vmul.f32 %v1201, 0.1
        %v1244 = vmul.f32 %v1205, 0.1
        %v1245 = vmul.f32 %v1209, 0.1
        %v1246 = vmul.f32 %v1213, 0.1
        %v1247 = vmul.f32 %v1217, 0.1
        %v1248 = vmul.f32 %v1221, 0.1
        %v1249 = vmul.f32 %v1225, 0.1
        %v1250 = vsel %vm1234, %v1197, %v1242
        %v1251 = vsel %vm1235, %v1201, %v1243
        %v1252 = vsel %vm1236, %v1205, %v1244
        %v1253 = vsel %vm1237, %v1209, %v1245
        %v1254 = vsel %vm1238, %v1213, %v1246
        %v1255 = vsel %vm1239, %v1217, %v1247
        %v1256 = vsel %vm1240, %v1221, %v1248
        %v1257 = vsel %vm1241, %v1225, %v1249
        %v1258 = vpack.c.bf16 %v1250, %v1250
        %v1259 = vpack.c.bf16 %v1251, %v1251
        %v1260 = vpack.c.bf16 %v1252, %v1252
        %v1261 = vpack.c.bf16 %v1253, %v1253
        %v1262 = vpack.c.bf16 %v1254, %v1254
        %v1263 = vpack.c.bf16 %v1255, %v1255
        %v1264 = vpack.c.bf16 %v1256, %v1256
        %v1265 = vpack.c.bf16 %v1257, %v1257
        %vm1266 = vsmask.f32 3328
        %vm1267 = vsmask.f32 7440
        %vm1268 = vmor %vm1266, %vm1267
        %v1270 = vshrl.u32 %v726, 16
        %v1272 = vrot.slane %v1270, 4
        %v1273 = vshll.u32 %v726, 16
        %v1275 = vrot.slane %v1273, 5
        %v1276 = vor.u32 %v1272, %v1275
        %v1277 = vrot.slane %v1276, 4
        %v1279 = vshll.u32 %v727, 16
        %v1281 = vrot.slane %v1279, 5
        %v1282 = vsel %vm1268, %v1277, %v1281
        %v1284 = vshrl.u32 %v728, 16
        %v1286 = vrot.slane %v1284, 4
        %v1287 = vshll.u32 %v728, 16
        %v1289 = vrot.slane %v1287, 5
        %v1290 = vor.u32 %v1286, %v1289
        %v1291 = vrot.slane %v1290, 4
        %v1293 = vshll.u32 %v729, 16
        %v1295 = vrot.slane %v1293, 5
        %v1296 = vsel %vm1268, %v1291, %v1295
        %v1298 = vshrl.u32 %v730, 16
        %v1300 = vrot.slane %v1298, 4
        %v1301 = vshll.u32 %v730, 16
        %v1303 = vrot.slane %v1301, 5
        %v1304 = vor.u32 %v1300, %v1303
        %v1305 = vrot.slane %v1304, 4
        %v1307 = vshll.u32 %v731, 16
        %v1309 = vrot.slane %v1307, 5
        %v1310 = vsel %vm1268, %v1305, %v1309
        %v1312 = vshrl.u32 %v732, 16
        %v1314 = vrot.slane %v1312, 4
        %v1315 = vshll.u32 %v732, 16
        %v1317 = vrot.slane %v1315, 5
        %v1318 = vor.u32 %v1314, %v1317
        %v1319 = vrot.slane %v1318, 4
        %v1321 = vshll.u32 %v733, 16
        %v1323 = vrot.slane %v1321, 5
        %v1324 = vsel %vm1268, %v1319, %v1323
        %v1326 = vshrl.u32 %v734, 16
        %v1328 = vrot.slane %v1326, 4
        %v1329 = vshll.u32 %v734, 16
        %v1331 = vrot.slane %v1329, 5
        %v1332 = vor.u32 %v1328, %v1331
        %v1333 = vrot.slane %v1332, 4
        %v1335 = vshll.u32 %v735, 16
        %v1337 = vrot.slane %v1335, 5
        %v1338 = vsel %vm1268, %v1333, %v1337
        %v1340 = vshrl.u32 %v736, 16
        %v1342 = vrot.slane %v1340, 4
        %v1343 = vshll.u32 %v736, 16
        %v1345 = vrot.slane %v1343, 5
        %v1346 = vor.u32 %v1342, %v1345
        %v1347 = vrot.slane %v1346, 4
        %v1349 = vshll.u32 %v737, 16
        %v1351 = vrot.slane %v1349, 5
        %v1352 = vsel %vm1268, %v1347, %v1351
        %v1354 = vshrl.u32 %v738, 16
        %v1356 = vrot.slane %v1354, 4
        %v1357 = vshll.u32 %v738, 16
        %v1359 = vrot.slane %v1357, 5
        %v1360 = vor.u32 %v1356, %v1359
        %v1361 = vrot.slane %v1360, 4
        %v1363 = vshll.u32 %v739, 16
        %v1365 = vrot.slane %v1363, 5
        %v1366 = vsel %vm1268, %v1361, %v1365
        %v1368 = vshrl.u32 %v740, 16
        %v1370 = vrot.slane %v1368, 4
        %v1371 = vshll.u32 %v740, 16
        %v1373 = vrot.slane %v1371, 5
        %v1374 = vor.u32 %v1370, %v1373
        %v1375 = vrot.slane %v1374, 4
        %v1377 = vshll.u32 %v741, 16
        %v1379 = vrot.slane %v1377, 5
        %v1380 = vsel %vm1268, %v1375, %v1379
        %v1382 = vshrl.u32 %v1091, 16
        %v1384 = vrot.slane %v1382, 4
        %v1385 = vshll.u32 %v1091, 16
        %v1387 = vrot.slane %v1385, 5
        %v1388 = vor.u32 %v1384, %v1387
        %v1389 = vrot.slane %v1388, 4
        %v1391 = vshll.u32 %v1092, 16
        %v1393 = vrot.slane %v1391, 5
        %v1394 = vsel %vm1268, %v1389, %v1393
        %v1396 = vshrl.u32 %v1093, 16
        %v1398 = vrot.slane %v1396, 4
        %v1399 = vshll.u32 %v1093, 16
        %v1401 = vrot.slane %v1399, 5
        %v1402 = vor.u32 %v1398, %v1401
        %v1403 = vrot.slane %v1402, 4
        %v1405 = vshll.u32 %v1094, 16
        %v1407 = vrot.slane %v1405, 5
        %v1408 = vsel %vm1268, %v1403, %v1407
        %v1410 = vshrl.u32 %v1095, 16
        %v1412 = vrot.slane %v1410, 4
        %v1413 = vshll.u32 %v1095, 16
        %v1415 = vrot.slane %v1413, 5
        %v1416 = vor.u32 %v1412, %v1415
        %v1417 = vrot.slane %v1416, 4
        %v1419 = vshll.u32 %v1096, 16
        %v1421 = vrot.slane %v1419, 5
        %v1422 = vsel %vm1268, %v1417, %v1421
        %v1424 = vshrl.u32 %v1097, 16
        %v1426 = vrot.slane %v1424, 4
        %v1427 = vshll.u32 %v1097, 16
        %v1429 = vrot.slane %v1427, 5
        %v1430 = vor.u32 %v1426, %v1429
        %v1431 = vrot.slane %v1430, 4
        %v1433 = vshll.u32 %v1098, 16
        %v1435 = vrot.slane %v1433, 5
        %v1436 = vsel %vm1268, %v1431, %v1435
        %v1438 = vshrl.u32 %v1099, 16
        %v1440 = vrot.slane %v1438, 4
        %v1441 = vshll.u32 %v1099, 16
        %v1443 = vrot.slane %v1441, 5
        %v1444 = vor.u32 %v1440, %v1443
        %v1445 = vrot.slane %v1444, 4
        %v1447 = vshll.u32 %v1100, 16
        %v1449 = vrot.slane %v1447, 5
        %v1450 = vsel %vm1268, %v1445, %v1449
        %v1452 = vshrl.u32 %v1101, 16
        %v1454 = vrot.slane %v1452, 4
        %v1455 = vshll.u32 %v1101, 16
        %v1457 = vrot.slane %v1455, 5
        %v1458 = vor.u32 %v1454, %v1457
        %v1459 = vrot.slane %v1458, 4
        %v1461 = vshll.u32 %v1102, 16
        %v1463 = vrot.slane %v1461, 5
        %v1464 = vsel %vm1268, %v1459, %v1463
        %v1466 = vshrl.u32 %v1103, 16
        %v1468 = vrot.slane %v1466, 4
        %v1469 = vshll.u32 %v1103, 16
        %v1471 = vrot.slane %v1469, 5
        %v1472 = vor.u32 %v1468, %v1471
        %v1473 = vrot.slane %v1472, 4
        %v1475 = vshll.u32 %v1104, 16
        %v1477 = vrot.slane %v1475, 5
        %v1478 = vsel %vm1268, %v1473, %v1477
        %v1480 = vshrl.u32 %v1105, 16
        %v1482 = vrot.slane %v1480, 4
        %v1483 = vshll.u32 %v1105, 16
        %v1485 = vrot.slane %v1483, 5
        %v1486 = vor.u32 %v1482, %v1485
        %v1487 = vrot.slane %v1486, 4
        %v1489 = vshll.u32 %v1106, 16
        %v1491 = vrot.slane %v1489, 5
        %v1492 = vsel %vm1268, %v1487, %v1491
        %v1494 = vshrl.u32 %v742, 16
        %v1496 = vrot.slane %v1494, 4
        %v1497 = vshll.u32 %v742, 16
        %v1499 = vrot.slane %v1497, 5
        %v1500 = vor.u32 %v1496, %v1499
        %v1501 = vrot.slane %v1500, 4
        %v1503 = vshll.u32 %v743, 16
        %v1505 = vrot.slane %v1503, 5
        %v1506 = vsel %vm1268, %v1501, %v1505
        %v1515 = vunpack.c.l.b16 %v726
        %v1516 = vunpack.c.l.b16 %v728
        %v1517 = vunpack.c.l.b16 %v730
        %v1518 = vunpack.c.l.b16 %v732
        %v1519 = vunpack.c.l.b16 %v734
        %v1520 = vunpack.c.l.b16 %v736
        %v1521 = vunpack.c.l.b16 %v738
        %v1522 = vunpack.c.l.b16 %v740
        %v1523 = vpack.c.b16 %v1516, %v1515
        %v1524 = vpack.c.b16 %v1518, %v1517
        %v1525 = vpack.c.b16 %v1520, %v1519
        %v1526 = vpack.c.b16 %v1522, %v1521
        %v1535 = vunpack.c.l.b16 %v899
        %v1536 = vunpack.c.l.b16 %v900
        %v1537 = vunpack.c.l.b16 %v901
        %v1538 = vunpack.c.l.b16 %v902
        %v1539 = vunpack.c.l.b16 %v903
        %v1540 = vunpack.c.l.b16 %v904
        %v1541 = vunpack.c.l.b16 %v905
        %v1542 = vunpack.c.l.b16 %v906
        %v1543 = vpack.c.b16 %v1536, %v1535
        %v1544 = vpack.c.b16 %v1538, %v1537
        %v1545 = vpack.c.b16 %v1540, %v1539
        %v1546 = vpack.c.b16 %v1542, %v1541
        %1547 = vrot.lane.b32.xlu0 %v1543, 8
        %v1548 = vpop.permute.xlu0 %1547
        %1549 = vrot.lane.b32.xlu0 %v1544, 8
        %v1550 = vpop.permute.xlu0 %1549
        %1551 = vrot.lane.b32.xlu0 %v1545, 8
        %v1552 = vpop.permute.xlu0 %1551
        %1553 = vrot.lane.b32.xlu0 %v1546, 8
        %v1554 = vpop.permute.xlu0 %1553
        %v1555 = vunpack.c.l.b16 %v1282
        %v1556 = vunpack.c.l.b16 %v1296
        %v1557 = vunpack.c.l.b16 %v1310
        %v1558 = vunpack.c.l.b16 %v1324
        %v1559 = vunpack.c.l.b16 %v1338
        %v1560 = vunpack.c.l.b16 %v1352
        %v1561 = vunpack.c.l.b16 %v1366
        %v1562 = vunpack.c.l.b16 %v1380
        %v1563 = vpack.c.b16 %v1556, %v1555
        %v1564 = vpack.c.b16 %v1558, %v1557
        %v1565 = vpack.c.b16 %v1560, %v1559
        %v1566 = vpack.c.b16 %v1562, %v1561
        %1567 = vrot.lane.b32.xlu0 %v1563, 16
        %v1568 = vpop.permute.xlu0 %1567
        %1569 = vrot.lane.b32.xlu0 %v1564, 16
        %v1570 = vpop.permute.xlu0 %1569
        %1571 = vrot.lane.b32.xlu0 %v1565, 16
        %v1572 = vpop.permute.xlu0 %1571
        %1573 = vrot.lane.b32.xlu0 %v1566, 16
        %v1574 = vpop.permute.xlu0 %1573
        %v1583 = vunpack.c.l.b16 %v1091
        %v1584 = vunpack.c.l.b16 %v1093
        %v1585 = vunpack.c.l.b16 %v1095
        %v1586 = vunpack.c.l.b16 %v1097
        %v1587 = vunpack.c.l.b16 %v1099
        %v1588 = vunpack.c.l.b16 %v1101
        %v1589 = vunpack.c.l.b16 %v1103
        %v1590 = vunpack.c.l.b16 %v1105
        %v1591 = vpack.c.b16 %v1584, %v1583
        %v1592 = vpack.c.b16 %v1586, %v1585
        %v1593 = vpack.c.b16 %v1588, %v1587
        %v1594 = vpack.c.b16 %v1590, %v1589
        %1595 = vrot.lane.b32.xlu0 %v1591, 24
        %v1596 = vpop.permute.xlu0 %1595
        %1597 = vrot.lane.b32.xlu0 %v1592, 24
        %v1598 = vpop.permute.xlu0 %1597
        %1599 = vrot.lane.b32.xlu0 %v1593, 24
        %v1600 = vpop.permute.xlu0 %1599
        %1601 = vrot.lane.b32.xlu0 %v1594, 24
        %v1602 = vpop.permute.xlu0 %1601
        %v1611 = vunpack.c.l.b16 %v1258
        %v1612 = vunpack.c.l.b16 %v1259
        %v1613 = vunpack.c.l.b16 %v1260
        %v1614 = vunpack.c.l.b16 %v1261
        %v1615 = vunpack.c.l.b16 %v1262
        %v1616 = vunpack.c.l.b16 %v1263
        %v1617 = vunpack.c.l.b16 %v1264
        %v1618 = vunpack.c.l.b16 %v1265
        %v1619 = vpack.c.b16 %v1612, %v1611
        %v1620 = vpack.c.b16 %v1614, %v1613
        %v1621 = vpack.c.b16 %v1616, %v1615
        %v1622 = vpack.c.b16 %v1618, %v1617
        %1623 = vrot.lane.b32.xlu0 %v1619, 32
        %v1624 = vpop.permute.xlu0 %1623
        %1625 = vrot.lane.b32.xlu0 %v1620, 32
        %v1626 = vpop.permute.xlu0 %1625
        %1627 = vrot.lane.b32.xlu0 %v1621, 32
        %v1628 = vpop.permute.xlu0 %1627
        %1629 = vrot.lane.b32.xlu0 %v1622, 32
        %v1630 = vpop.permute.xlu0 %1629
        %v1631 = vunpack.c.l.b16 %v1394
        %v1632 = vunpack.c.l.b16 %v1408
        %v1633 = vunpack.c.l.b16 %v1422
        %v1634 = vunpack.c.l.b16 %v1436
        %v1635 = vunpack.c.l.b16 %v1450
        %v1636 = vunpack.c.l.b16 %v1464
        %v1637 = vunpack.c.l.b16 %v1478
        %v1638 = vunpack.c.l.b16 %v1492
        %v1639 = vpack.c.b16 %v1632, %v1631
        %v1640 = vpack.c.b16 %v1634, %v1633
        %v1641 = vpack.c.b16 %v1636, %v1635
        %v1642 = vpack.c.b16 %v1638, %v1637
        %1643 = vrot.lane.b32.xlu0 %v1639, 40
        %v1644 = vpop.permute.xlu0 %1643
        %1645 = vrot.lane.b32.xlu0 %v1640, 40
        %v1646 = vpop.permute.xlu0 %1645
        %1647 = vrot.lane.b32.xlu0 %v1641, 40
        %v1648 = vpop.permute.xlu0 %1647
        %1649 = vrot.lane.b32.xlu0 %v1642, 40
        %v1650 = vpop.permute.xlu0 %1649
        %v1652 = vunpack.c.l.b16 %v742
        %v1653 = vpack.c.b16 %v1517, %v1516
        %v1654 = vpack.c.b16 %v1519, %v1518
        %v1655 = vpack.c.b16 %v1521, %v1520
        %v1656 = vpack.c.b16 %v1652, %v1522
        %1657 = vrot.lane.b32.xlu0 %v1653, 48
        %v1658 = vpop.permute.xlu0 %1657
        %1659 = vrot.lane.b32.xlu0 %v1654, 48
        %v1660 = vpop.permute.xlu0 %1659
        %1661 = vrot.lane.b32.xlu0 %v1655, 48
        %v1662 = vpop.permute.xlu0 %1661
        %1663 = vrot.lane.b32.xlu0 %v1656, 48
        %v1664 = vpop.permute.xlu0 %1663
        %v1666 = vunpack.c.l.b16 %v907
        %v1667 = vpack.c.b16 %v1537, %v1536
        %v1668 = vpack.c.b16 %v1539, %v1538
        %v1669 = vpack.c.b16 %v1541, %v1540
        %v1670 = vpack.c.b16 %v1666, %v1542
        %1671 = vrot.lane.b32.xlu0 %v1667, 56
        %v1672 = vpop.permute.xlu0 %1671
        %1673 = vrot.lane.b32.xlu0 %v1668, 56
        %v1674 = vpop.permute.xlu0 %1673
        %1675 = vrot.lane.b32.xlu0 %v1669, 56
        %v1676 = vpop.permute.xlu0 %1675
        %1677 = vrot.lane.b32.xlu0 %v1670, 56
        %v1678 = vpop.permute.xlu0 %1677
        %v1679 = vunpack.c.l.b16 %v1506
        %v1680 = vpack.c.b16 %v1557, %v1556
        %v1681 = vpack.c.b16 %v1559, %v1558
        %v1682 = vpack.c.b16 %v1561, %v1560
        %v1683 = vpack.c.b16 %v1679, %v1562
        %1684 = vrot.lane.b32.xlu0 %v1680, 64
        %v1685 = vpop.permute.xlu0 %1684
        %1686 = vrot.lane.b32.xlu0 %v1681, 64
        %v1687 = vpop.permute.xlu0 %1686
        %1688 = vrot.lane.b32.xlu0 %v1682, 64
        %v1689 = vpop.permute.xlu0 %1688
        %1690 = vrot.lane.b32.xlu0 %v1683, 64
        %v1691 = vpop.permute.xlu0 %1690
        %vm1692 = vcmask 64512
        %v1695 = vsel %vm1692, %v1523, %v1548
        %v1698 = vsel %vm1692, %v1524, %v1550
        %v1701 = vsel %vm1692, %v1525, %v1552
        %v1704 = vsel %vm1692, %v1526, %v1554
        %vm1705 = vcmask 130048
        %v1707 = vsel %vm1705, %v1695, %v1568
        %v1709 = vsel %vm1705, %v1698, %v1570
        %v1711 = vsel %vm1705, %v1701, %v1572
        %v1713 = vsel %vm1705, %v1704, %v1574
        %vm1714 = vcmask 195584
        %v1716 = vsel %vm1714, %v1707, %v1596
        %v1718 = vsel %vm1714, %v1709, %v1598
        %v1720 = vsel %vm1714, %v1711, %v1600
        %v1722 = vsel %vm1714, %v1713, %v1602
        %vm1723 = vcmask 261120
        %v1725 = vsel %vm1723, %v1716, %v1624
        %v1727 = vsel %vm1723, %v1718, %v1626
        %v1729 = vsel %vm1723, %v1720, %v1628
        %v1731 = vsel %vm1723, %v1722, %v1630
        %vm1732 = vcmask 326656
        %v1734 = vsel %vm1732, %v1725, %v1644
        %v1736 = vsel %vm1732, %v1727, %v1646
        %v1738 = vsel %vm1732, %v1729, %v1648
        %v1740 = vsel %vm1732, %v1731, %v1650
        %vm1741 = vcmask 392192
        %v1743 = vsel %vm1741, %v1734, %v1658
        %v1745 = vsel %vm1741, %v1736, %v1660
        %v1747 = vsel %vm1741, %v1738, %v1662
        %v1749 = vsel %vm1741, %v1740, %v1664
        %vm1750 = vcmask 457728
        %v1752 = vsel %vm1750, %v1743, %v1672
        %v1754 = vsel %vm1750, %v1745, %v1674
        %v1756 = vsel %vm1750, %v1747, %v1676
        %v1758 = vsel %vm1750, %v1749, %v1678
        %vm1759 = vcmask 523264
        %v1761 = vsel %vm1759, %v1752, %v1685
        %v1763 = vsel %vm1759, %v1754, %v1687
        %v1765 = vsel %vm1759, %v1756, %v1689
        %v1767 = vsel %vm1759, %v1758, %v1691
        %v1768 = vld [vmem:[%s2] sm:$0xf]
        %v1769 = vld [vmem:[%s2 + $0x4] sm:$0xf]
        %v1770 = vld [vmem:[%s2 + $0x8] sm:$0xf]
        %v1771 = vld [vmem:[%s2 + $0xc] sm:$0xf]
        %v1772 = vld [vmem:[%s2 + $0x10] sm:$0xf]
        %v1773 = vld [vmem:[%s2 + $0x14] sm:$0xf]
        %v1774 = vld [vmem:[%s2 + $0x18] sm:$0xf]
        %v1775 = vld [vmem:[%s2 + $0x1c] sm:$0xf]
        %v1776 = vld [vmem:[%s2 + $0x20] sm:$0xf]
        %v1786 = vunpack.c.l.b16 %v1768
        %v1787 = vunpack.c.l.b16 %v1769
        %v1788 = vunpack.c.l.b16 %v1770
        %v1789 = vunpack.c.l.b16 %v1771
        %v1790 = vunpack.c.l.b16 %v1772
        %v1791 = vunpack.c.l.b16 %v1773
        %v1792 = vunpack.c.l.b16 %v1774
        %v1793 = vunpack.c.l.b16 %v1775
        %v1794 = vunpack.c.l.b16 %v1776
        %v1795 = vpack.c.b16 %v1787, %v1786
        %v1796 = vpack.c.b16 %v1789, %v1788
        %v1797 = vpack.c.b16 %v1791, %v1790
        %v1798 = vpack.c.b16 %v1793, %v1792
        %v1799 = vpack.c.b16 %v1794, %v1794
        %vm1804 = vcmask 588800
        %v1805 = vsel %vm1804, %v1761, 0
        %v1807 = vsel %vm1804, %v1763, 0
        %v1809 = vsel %vm1804, %v1765, 0
        %v1811 = vsel %vm1804, %v1767, 0
        %vm1813 = vcmask 1043456
        %v1815 = vsel %vm1813, %v1799, 0
        %1817 = vmatpush.bf16.msra.mxu0 0
        %1818 = vmatpush.bf16.msra.mxu0 0
        %1819 = vmatpush.bf16.msra.mxu0 0
        %1820 = vmatpush.bf16.msra.mxu0 %v1815
        %1821 = vmatpush.bf16.msra.mxu0 %v1798
        %1822 = vmatpush.bf16.msra.mxu0 %v1797
        %1823 = vmatpush.bf16.msra.mxu0 %v1796
        %1824 = vmatpush.bf16.msra.mxu0 %v1795
        %1825 = vmatmul.bf16.gmra.mxu0 %v1805
        %v1826 = vpop.f32.mrf.mxu0
        %v1827 = vadd.f32 0.0, %v1826
        %v1828 = vpop.f32.mrf.mxu0
        %v1829 = vadd.f32 0.0, %v1828
        %1830 = vmatmul.bf16.gmra.mxu0 %v1807
        %v1831 = vpop.f32.mrf.mxu0
        %v1832 = vadd.f32 0.0, %v1831
        %v1833 = vpop.f32.mrf.mxu0
        %v1834 = vadd.f32 0.0, %v1833
        %1835 = vmatmul.bf16.gmra.mxu0 %v1809
        %v1836 = vpop.f32.mrf.mxu0
        %v1837 = vadd.f32 0.0, %v1836
        %v1838 = vpop.f32.mrf.mxu0
        %v1839 = vadd.f32 0.0, %v1838
        %1840 = vmatmul.bf16.gmra.mxu0 %v1811
        %v1841 = vpop.f32.mrf.mxu0
        %v1842 = vadd.f32 0.0, %v1841
        %v1843 = vpop.f32.mrf.mxu0
        %v1844 = vadd.f32 0.0, %v1843
        %1845 = vdwg.mxu0
        %vm1846 = vcmp.gt.f32.partialorder %v1827, 0.0
        %vm1847 = vcmp.gt.f32.partialorder %v1829, 0.0
        %vm1848 = vcmp.gt.f32.partialorder %v1832, 0.0
        %vm1849 = vcmp.gt.f32.partialorder %v1834, 0.0
        %vm1850 = vcmp.gt.f32.partialorder %v1837, 0.0
        %vm1851 = vcmp.gt.f32.partialorder %v1839, 0.0
        %vm1852 = vcmp.gt.f32.partialorder %v1842, 0.0
        %vm1853 = vcmp.gt.f32.partialorder %v1844, 0.0
        %v1854 = vmul.f32 %v1827, 0.1
        %v1855 = vmul.f32 %v1829, 0.1
        %v1856 = vmul.f32 %v1832, 0.1
        %v1857 = vmul.f32 %v1834, 0.1
        %v1858 = vmul.f32 %v1837, 0.1
        %v1859 = vmul.f32 %v1839, 0.1
        %v1860 = vmul.f32 %v1842, 0.1
        %v1861 = vmul.f32 %v1844, 0.1
        %v1862 = vsel %vm1846, %v1827, %v1854
        %v1863 = vsel %vm1847, %v1829, %v1855
        %v1864 = vsel %vm1848, %v1832, %v1856
        %v1865 = vsel %vm1849, %v1834, %v1857
        %v1866 = vsel %vm1850, %v1837, %v1858
        %v1867 = vsel %vm1851, %v1839, %v1859
        %v1868 = vsel %vm1852, %v1842, %v1860
        %v1869 = vsel %vm1853, %v1844, %v1861
        %v1870 = vpack.c.bf16 %v1863, %v1862
        %v1871 = vpack.c.bf16 %v1865, %v1864
        %v1872 = vpack.c.bf16 %v1867, %v1866
        %v1873 = vpack.c.bf16 %v1869, %v1868
        %v1874 = vld [vmem:[%s3] sm:$0xf]
        %v1876 = vsel %vm1692, %v1870, 0
        %v1879 = vsel %vm1692, %v1871, 0
        %v1882 = vsel %vm1692, %v1872, 0
        %v1885 = vsel %vm1692, %v1873, 0
        %v1888 = vsel %vm1813, %v1874, 0
        %1890 = vmatpush.bf16.msra.mxu0 0
        %1891 = vmatpush.bf16.msra.mxu0 0
        %1892 = vmatpush.bf16.msra.mxu0 0
        %1893 = vmatpush.bf16.msra.mxu0 0
        %1894 = vmatpush.bf16.msra.mxu0 0
        %1895 = vmatpush.bf16.msra.mxu0 0
        %1896 = vmatpush.bf16.msra.mxu0 0
        %1897 = vmatpush.bf16.msra.mxu0 %v1888
        %1898 = vmatmul.bf16.gmra.mxu0 %v1876
        %v1899 = vpop.f32.mrf.mxu0
        %v1900 = vadd.f32 0.0, %v1899
        %v1901 = vpop.f32.mrf.mxu0
        %v1902 = vadd.f32 0.0, %v1901
        %1903 = vmatmul.bf16.gmra.mxu0 %v1879
        %v1904 = vpop.f32.mrf.mxu0
        %v1905 = vadd.f32 0.0, %v1904
        %v1906 = vpop.f32.mrf.mxu0
        %v1907 = vadd.f32 0.0, %v1906
        %1908 = vmatmul.bf16.gmra.mxu0 %v1882
        %v1909 = vpop.f32.mrf.mxu0
        %v1910 = vadd.f32 0.0, %v1909
        %v1911 = vpop.f32.mrf.mxu0
        %v1912 = vadd.f32 0.0, %v1911
        %1913 = vmatmul.bf16.gmra.mxu0 %v1885
        %v1914 = vpop.f32.mrf.mxu0
        %v1915 = vadd.f32 0.0, %v1914
        %v1916 = vpop.f32.mrf.mxu0
        %v1917 = vadd.f32 0.0, %v1916
        %1918 = vdwg.mxu0
        %vm1919 = vcmp.gt.f32.partialorder %v1900, 0.0
        %vm1920 = vcmp.gt.f32.partialorder %v1902, 0.0
        %vm1921 = vcmp.gt.f32.partialorder %v1905, 0.0
        %vm1922 = vcmp.gt.f32.partialorder %v1907, 0.0
        %vm1923 = vcmp.gt.f32.partialorder %v1910, 0.0
        %vm1924 = vcmp.gt.f32.partialorder %v1912, 0.0
        %vm1925 = vcmp.gt.f32.partialorder %v1915, 0.0
        %vm1926 = vcmp.gt.f32.partialorder %v1917, 0.0
        %v1927 = vmul.f32 %v1900, 0.1
        %v1928 = vmul.f32 %v1902, 0.1
        %v1929 = vmul.f32 %v1905, 0.1
        %v1930 = vmul.f32 %v1907, 0.1
        %v1931 = vmul.f32 %v1910, 0.1
        %v1932 = vmul.f32 %v1912, 0.1
        %v1933 = vmul.f32 %v1915, 0.1
        %v1934 = vmul.f32 %v1917, 0.1
        %v1935 = vsel %vm1919, %v1900, %v1927
        %v1936 = vsel %vm1920, %v1902, %v1928
        %v1937 = vsel %vm1921, %v1905, %v1929
        %v1938 = vsel %vm1922, %v1907, %v1930
        %v1939 = vsel %vm1923, %v1910, %v1931
        %v1940 = vsel %vm1924, %v1912, %v1932
        %v1941 = vsel %vm1925, %v1915, %v1933
        %v1942 = vsel %vm1926, %v1917, %v1934
        %v1943 = vld [vmem:[%s4] sm:$0x3]
        %v1944 = vpack.c.b16 %v1129, %v1127
        %v1945 = vpack.c.b16 %v1133, %v1131
        %v1946 = vpack.c.b16 %v1137, %v1135
        %v1947 = vpack.c.b16 %v1141, %v1139
        %v1949 = vsel %vm580, %v1944, 0
        %v1952 = vsel %vm580, %v1945, 0
        %v1955 = vsel %vm580, %v1946, 0
        %v1958 = vsel %vm580, %v1947, 0
        %v1961 = vsel %vm611, %v1943, 0
        %1963 = vmatpush.bf16.msra.mxu0 0
        %1964 = vmatpush.bf16.msra.mxu0 0
        %1965 = vmatpush.bf16.msra.mxu0 0
        %1966 = vmatpush.bf16.msra.mxu0 0
        %1967 = vmatpush.bf16.msra.mxu0 0
        %1968 = vmatpush.bf16.msra.mxu0 0
        %1969 = vmatpush.bf16.msra.mxu0 0
        %1970 = vmatpush.bf16.msra.mxu0 %v1961
        %1971 = vmatmul.bf16.gmra.mxu0 %v1949
        %v1972 = vpop.f32.mrf.mxu0
        %v1973 = vadd.f32 0.0, %v1972
        %v1974 = vpop.f32.mrf.mxu0
        %v1975 = vadd.f32 0.0, %v1974
        %1976 = vmatmul.bf16.gmra.mxu0 %v1952
        %v1977 = vpop.f32.mrf.mxu0
        %v1978 = vadd.f32 0.0, %v1977
        %v1979 = vpop.f32.mrf.mxu0
        %v1980 = vadd.f32 0.0, %v1979
        %1981 = vmatmul.bf16.gmra.mxu0 %v1955
        %v1982 = vpop.f32.mrf.mxu0
        %v1983 = vadd.f32 0.0, %v1982
        %v1984 = vpop.f32.mrf.mxu0
        %v1985 = vadd.f32 0.0, %v1984
        %1986 = vmatmul.bf16.gmra.mxu0 %v1958
        %v1987 = vpop.f32.mrf.mxu0
        %v1988 = vadd.f32 0.0, %v1987
        %v1989 = vpop.f32.mrf.mxu0
        %v1990 = vadd.f32 0.0, %v1989
        %1991 = vdwg.mxu0
        %v1992 = vadd.f32 %v1935, %v1973
        %v1993 = vadd.f32 %v1936, %v1975
        %v1994 = vadd.f32 %v1937, %v1978
        %v1995 = vadd.f32 %v1938, %v1980
        %v1996 = vadd.f32 %v1939, %v1983
        %v1997 = vadd.f32 %v1940, %v1985
        %v1998 = vadd.f32 %v1941, %v1988
        %v1999 = vadd.f32 %v1942, %v1990
        %vm2000 = vcmp.gt.f32.partialorder %v1992, 0.0
        %vm2001 = vcmp.gt.f32.partialorder %v1993, 0.0
        %vm2002 = vcmp.gt.f32.partialorder %v1994, 0.0
        %vm2003 = vcmp.gt.f32.partialorder %v1995, 0.0
        %vm2004 = vcmp.gt.f32.partialorder %v1996, 0.0
        %vm2005 = vcmp.gt.f32.partialorder %v1997, 0.0
        %vm2006 = vcmp.gt.f32.partialorder %v1998, 0.0
        %vm2007 = vcmp.gt.f32.partialorder %v1999, 0.0
        %v2008 = vmul.f32 %v1992, 0.1
        %v2009 = vmul.f32 %v1993, 0.1
        %v2010 = vmul.f32 %v1994, 0.1
        %v2011 = vmul.f32 %v1995, 0.1
        %v2012 = vmul.f32 %v1996, 0.1
        %v2013 = vmul.f32 %v1997, 0.1
        %v2014 = vmul.f32 %v1998, 0.1
        %v2015 = vmul.f32 %v1999, 0.1
        %v2016 = vsel %vm2000, %v1992, %v2008
        %v2017 = vsel %vm2001, %v1993, %v2009
        %v2018 = vsel %vm2002, %v1994, %v2010
        %v2019 = vsel %vm2003, %v1995, %v2011
        %v2020 = vsel %vm2004, %v1996, %v2012
        %v2021 = vsel %vm2005, %v1997, %v2013
        %v2022 = vsel %vm2006, %v1998, %v2014
        %v2023 = vsel %vm2007, %v1999, %v2015
        %2024 = vst.msk [vmem:[%s199] sm:$0xff] %vm1723, %v2016
        %2025 = vst.msk [vmem:[%s199 + $0x8] sm:$0xff] %vm1723, %v2017
        %2026 = vst.msk [vmem:[%s199 + $0x10] sm:$0xff] %vm1723, %v2018
        %2027 = vst.msk [vmem:[%s199 + $0x18] sm:$0xff] %vm1723, %v2019
        %2028 = vst.msk [vmem:[%s199 + $0x20] sm:$0xff] %vm1723, %v2020
        %2029 = vst.msk [vmem:[%s199 + $0x28] sm:$0xff] %vm1723, %v2021
        %2030 = vst.msk [vmem:[%s199 + $0x30] sm:$0xff] %vm1723, %v2022
        %2031 = vst.msk [vmem:[%s199 + $0x38] sm:$0xff] %vm1723, %v2023
        %s2032 = sand.u32 %s134, 1
        %s2033 = scalar_lea.sflag [#allocation5], %s2032
        %s2034 = sand.u32 %s134, 1
        %s2035 = smul.addr %s2034, 64
        %s2036 = scalar_lea.vmem [#allocation4], %s2035
        // Predicated region
        $region83: #{resnet_bottleneck_block.1} parent=35 // pred_check
          %p2037 = pneg %p144
        $region84: #{resnet_bottleneck_block.1} parent=35 // pred_check_branch
          %2039 = sbr.rel (%p2037) target = $region86
        $region85: #{resnet_bottleneck_block.1} parent=35 // pred_region
          %s2040 = sadd.s32 %s25, %s26
          %s2041 = smul.u32 8, %s2040
          %2043 = vsyncadd %s2033, 0
          %s2044 = smul.addr %s24, 8
          %s2045 = sadd.s32 %s2041, %s2044
          %s2046 = smul.addr %s2045, 8
          %s2047 = scalar_lea.hbm %s5, %s2046
          %s2048 = sshll.u32 %s2036, 4
          %s2049 = int_to_ptr.vmem [resolvable:$true] %s2048
          %s2050 = sshll.u32 %s2047, 4
          %s2051 = int_to_ptr.hbm [resolvable:$true] %s2050
          %2056 = dma.vmem_to_hbm [thread:$0]  %s2049, 1024, %s2051, %s2033, 128, 128, 8
        $region86: #{resnet_bottleneck_block.1} parent=35 // pred_fallthru
          _
      $region36: #{resnet_bottleneck_block.1} parent=5 // pred_fallthru
        _
      %p2057 = scmp.le.s32.totalorder 2, %s14
      // Predicated region
      $region87: #{resnet_bottleneck_block.1} parent=5 // pred_check
        %p2058 = pneg %p2057
      $region88: #{resnet_bottleneck_block.1} parent=5 // pred_check_branch
        %2060 = sbr.rel (%p2058) target = $region90
      $region89: #{resnet_bottleneck_block.1} parent=5 // pred_region
        %s2061 = ssub.s32 %s14, 2
        // Predicated region
        $region91: #{resnet_bottleneck_block.1} parent=89 // pred_check
          %p2062 = pneg %p150
        $region92: #{resnet_bottleneck_block.1} parent=89 // pred_check_branch
          %2064 = sbr.rel (%p2062) target = $region94
        $region93: #{resnet_bottleneck_block.1} parent=89 // pred_region
          %s2065 = sand.u32 %s135, 1
          %s2066 = scalar_lea.sflag [#allocation5], %s2065
          %s2067 = sand.u32 %s135, 1
          %s2068 = smul.addr %s2067, 64
          %s2069 = scalar_lea.vmem [#allocation4], %s2068
          %2071 = dma.done %s2066, 1024
        $region94: #{resnet_bottleneck_block.1} parent=89 // pred_fallthru
          _
      $region90: #{resnet_bottleneck_block.1} parent=5 // pred_fallthru
        _
    $region6: #{resnet_bottleneck_block.1} parent=1 // loop_footer
      %s18 = sadd.s32 1, %s14
    $region7: #{resnet_bottleneck_block.1} parent=1 // loop_footer_branch
      %13 = sbr.rel target = $region3
    $region8: #{resnet_bottleneck_block.1} parent=1 // loop_exit
      _
    %2072 = vsyncpa [#allocation5], 1
    %s2073 = scalar_lea.sflag [#allocation5], 1
    %2074 = vsyncpa %s2073, 1
  %2075 = vsyncmov [#allocation3]
  %s2076 = vpop.sfrf %2075
  %p2077 = scmp.eq.s32.totalorder %s2076, 0
  %p2078 = pneg %p2077
  %2080 = shalt.err (%p2078)
  %s2081 = scalar_lea.sflag [#allocation3], 1
  %2082 = vsyncmov %s2081
  %s2083 = vpop.sfrf %2082
  %p2084 = scmp.eq.s32.totalorder %s2083, 0
  %p2085 = pneg %p2084
  %2087 = shalt.err (%p2085)

</llo_original>
